<compile_context>
chip_gen: v7x
topology: tpu7x:2x2x1
jax: 0.10.0
libtpu: 0.0.40
codegen_flags: <defaults>
</compile_context>

<pallas_src>
import functools

import jax
import jax.numpy as jnp
from jax.experimental import pallas as pl
from jax.experimental.pallas import tpu as pltpu


# -----------------------------------------------------------------------------
# Kernel 1: match ground truths to default boxes + encode regression targets
# -----------------------------------------------------------------------------
def _match_encode_kernel(truths_ref, labels_ref, dbox_pt_ref, dbox_cc_ref,
                         loc_t_ref, conf_t_ref, *, num_truths, threshold,
                         var0, var1):
    D = dbox_pt_ref.shape[1]

    dx1 = dbox_pt_ref[0:1, :]                      # (1, D) point-form dboxes
    dy1 = dbox_pt_ref[1:2, :]
    dx2 = dbox_pt_ref[2:3, :]
    dy2 = dbox_pt_ref[3:4, :]
    d_area = (dx2 - dx1) * (dy2 - dy1)

    lane = jax.lax.broadcasted_iota(jnp.int32, (1, D), 1)

    best_truth_ov = jnp.full((1, D), -1.0, jnp.float32)
    best_truth_idx = jnp.zeros((1, D), jnp.int32)
    best_prior_idx = []                            # list of (1, 1) int32

    # --- jaccard overlaps, streamed one truth at a time -----------------------
    for j in range(num_truths):
        tx1 = truths_ref[j, 0]
        ty1 = truths_ref[j, 1]
        tx2 = truths_ref[j, 2]
        ty2 = truths_ref[j, 3]
        t_area = (tx2 - tx1) * (ty2 - ty1)

        ix1 = jnp.maximum(dx1, tx1)
        iy1 = jnp.maximum(dy1, ty1)
        ix2 = jnp.minimum(dx2, tx2)
        iy2 = jnp.minimum(dy2, ty2)
        inter = jnp.maximum(ix2 - ix1, 0.0) * jnp.maximum(iy2 - iy1, 0.0)
        iou = inter / (d_area + t_area - inter)    # (1, D)

        upd = iou > best_truth_ov                  # first max wins (like argmax)
        best_truth_idx = jnp.where(upd, j, best_truth_idx)
        best_truth_ov = jnp.where(upd, iou, best_truth_ov)

        # best default box for this truth (first index attaining the max)
        mx = jnp.max(iou, axis=1, keepdims=True)                    # (1, 1)
        bpi = jnp.min(jnp.where(iou >= mx, lane, D),
                      axis=1, keepdims=True)                        # (1, 1)
        best_prior_idx.append(bpi)

    # --- forced match: each truth keeps its best default box ------------------
    for j in range(num_truths):
        mask = lane == best_prior_idx[j]
        best_truth_ov = jnp.where(mask, 2.0, best_truth_ov)
        best_truth_idx = jnp.where(mask, j, best_truth_idx)

    # --- gather matched truth coords / labels (one-hot selects over tiny T) ---
    mx1 = jnp.zeros((1, D), jnp.float32)
    my1 = jnp.zeros((1, D), jnp.float32)
    mx2 = jnp.zeros((1, D), jnp.float32)
    my2 = jnp.zeros((1, D), jnp.float32)
    lblv = jnp.zeros((1, D), jnp.int32)
    for j in range(num_truths):
        sel = best_truth_idx == j
        mx1 = jnp.where(sel, truths_ref[j, 0], mx1)
        my1 = jnp.where(sel, truths_ref[j, 1], my1)
        mx2 = jnp.where(sel, truths_ref[j, 2], mx2)
        my2 = jnp.where(sel, truths_ref[j, 3], my2)
        lblv = jnp.where(sel, labels_ref[j] + 1, lblv)

    conf = jnp.where(best_truth_ov < threshold, 0, lblv)
    conf_t_ref[...] = conf.astype(jnp.int32)

    # --- encode (cx, cy, w, h) offsets with variances --------------------------
    dcx = dbox_cc_ref[0:1, :]
    dcy = dbox_cc_ref[1:2, :]
    dw = dbox_cc_ref[2:3, :]
    dh = dbox_cc_ref[3:4, :]
    loc_t_ref[0:1, :] = ((mx1 + mx2) * 0.5 - dcx) / (var0 * dw)
    loc_t_ref[1:2, :] = ((my1 + my2) * 0.5 - dcy) / (var0 * dh)
    loc_t_ref[2:3, :] = jnp.log((mx2 - mx1) / dw) / var1
    loc_t_ref[3:4, :] = jnp.log((my2 - my1) / dh) / var1


def match_encode(truths, labels, dbox_pt_t, dbox_cc_t,
                 threshold=0.5, variances=(0.1, 0.2)):
    """truths (T,4) point form, labels (T,) int32, dboxes as (4, D) slabs."""
    T = truths.shape[0]
    D = dbox_pt_t.shape[1]
    kernel = functools.partial(_match_encode_kernel, num_truths=T,
                               threshold=float(threshold),
                               var0=float(variances[0]),
                               var1=float(variances[1]))
    return pl.pallas_call(
        kernel,
        out_shape=(jax.ShapeDtypeStruct((4, D), jnp.float32),
                   jax.ShapeDtypeStruct((1, D), jnp.int32)),
        in_specs=[pl.BlockSpec(memory_space=pltpu.MemorySpace.SMEM),
                  pl.BlockSpec(memory_space=pltpu.MemorySpace.SMEM),
                  pl.BlockSpec(memory_space=pltpu.MemorySpace.VMEM),
                  pl.BlockSpec(memory_space=pltpu.MemorySpace.VMEM)],
        out_specs=(pl.BlockSpec(memory_space=pltpu.MemorySpace.VMEM),
                   pl.BlockSpec(memory_space=pltpu.MemorySpace.VMEM)),
    )(truths, labels, dbox_pt_t, dbox_cc_t)


# -----------------------------------------------------------------------------
# Kernel 2: per-box cross entropy + per-box smooth-L1 row sums (lane-dense)
# -----------------------------------------------------------------------------
def _ce_sl1_kernel(conf_ref, lbl_ref, locp_ref, loct_ref, ce_ref, sl1_ref):
    conf = conf_ref[...]                                   # (C, tm)
    lbl = lbl_ref[...]                                     # (1, tm) int32

    m = jnp.max(conf, axis=0, keepdims=True)               # (1, tm)
    lse = m + jnp.log(jnp.sum(jnp.exp(conf - m), axis=0, keepdims=True))
    cls_iota = jax.lax.broadcasted_iota(jnp.int32, conf.shape, 0)
    onehot = (cls_iota == lbl).astype(conf.dtype)
    tgt = jnp.sum(conf * onehot, axis=0, keepdims=True)    # gathered target logit
    ce_ref[...] = lse - tgt

    d = locp_ref[...] - loct_ref[...]                      # (4, tm)
    ad = jnp.abs(d)
    sl = jnp.where(ad < 1.0, 0.5 * d * d, ad - 0.5)
    sl1_ref[...] = jnp.sum(sl, axis=0, keepdims=True)


def ce_smoothl1(conf_cm, labels_1m, locp_4m, loct_4m, tile_m=512):
    C, M = conf_cm.shape
    m_align = ((M + 127) // 128) * 128
    tile_m = min(tile_m, m_align)
    Mp = ((M + tile_m - 1) // tile_m) * tile_m
    if Mp != M:
        padm = ((0, 0), (0, Mp - M))
        conf_cm = jnp.pad(conf_cm, padm)
        labels_1m = jnp.pad(labels_1m, padm)
        locp_4m = jnp.pad(locp_4m, padm)
        loct_4m = jnp.pad(loct_4m, padm)

    ce, sl1 = pl.pallas_call(
        _ce_sl1_kernel,
        out_shape=(jax.ShapeDtypeStruct((1, Mp), jnp.float32),
                   jax.ShapeDtypeStruct((1, Mp), jnp.float32)),
        grid=(Mp // tile_m,),
        in_specs=[pl.BlockSpec((C, tile_m), lambda i: (0, i)),
                  pl.BlockSpec((1, tile_m), lambda i: (0, i)),
                  pl.BlockSpec((4, tile_m), lambda i: (0, i)),
                  pl.BlockSpec((4, tile_m), lambda i: (0, i))],
        out_specs=(pl.BlockSpec((1, tile_m), lambda i: (0, i)),
                   pl.BlockSpec((1, tile_m), lambda i: (0, i))),
        compiler_params=pltpu.CompilerParams(dimension_semantics=("parallel",)),
    )(conf_cm, labels_1m, locp_4m, loct_4m)
    return ce[:, :M], sl1[:, :M]


# -----------------------------------------------------------------------------
# Kernel 3: masked reductions -> loss_l sum, loss_c sum, num_pos
# -----------------------------------------------------------------------------
def _masked_sum_kernel(sl1_ref, ce_ref, pos_ref, sel_ref, ll_ref, lc_ref, np_ref):
    pos = pos_ref[...]
    ll_ref[...] = jnp.sum(sl1_ref[...] * pos, axis=1, keepdims=True)
    lc_ref[...] = jnp.sum(ce_ref[...] * sel_ref[...], axis=1, keepdims=True)
    np_ref[...] = jnp.sum(pos, axis=1, keepdims=True)


def masked_sums(sl1, ce, pos_f, sel_f):
    return pl.pallas_call(
        _masked_sum_kernel,
        out_shape=(jax.ShapeDtypeStruct((1, 1), jnp.float32),
                   jax.ShapeDtypeStruct((1, 1), jnp.float32),
                   jax.ShapeDtypeStruct((1, 1), jnp.float32)),
        in_specs=[pl.BlockSpec(memory_space=pltpu.MemorySpace.VMEM)] * 4,
        out_specs=(pl.BlockSpec(memory_space=pltpu.MemorySpace.VMEM),) * 3,
    )(sl1, ce, pos_f, sel_f)


# -----------------------------------------------------------------------------
# MultiBoxLoss forward (matches the PyTorch reference semantics)
# -----------------------------------------------------------------------------
def multibox_loss(loc_data, conf_data, dbox_list, targets,
                  jaccard_thresh=0.5, negpos_ratio=3):
    B, D, C = conf_data.shape

    # default boxes: center form and point form, transposed to (4, D) lane-dense
    dbox_cc_t = dbox_list.T
    dbox_pt = jnp.concatenate([dbox_list[:, :2] - dbox_list[:, 2:] / 2,
                               dbox_list[:, :2] + dbox_list[:, 2:] / 2], axis=1)
    dbox_pt_t = dbox_pt.T

    # per-image matching / encoding (mirrors the reference's host loop)
    loc_t_rows, conf_t_rows = [], []
    for b in range(B):
        t = targets[b]
        truths = t[:, :4].astype(jnp.float32)
        labels = t[:, 4].astype(jnp.int32)
        lt, ct = match_encode(truths, labels, dbox_pt_t, dbox_cc_t,
                              threshold=jaccard_thresh)
        loc_t_rows.append(lt)
        conf_t_rows.append(ct)
    loc_t = jnp.concatenate(loc_t_rows, axis=1)        # (4, B*D)
    conf_t = jnp.concatenate(conf_t_rows, axis=1)      # (1, B*D) int32

    # lane-dense prediction slabs
    M = B * D
    conf_cm = conf_data.reshape(M, C).T                # (C, M)
    locp_4m = loc_data.reshape(M, 4).T                 # (4, M)

    ce, sl1 = ce_smoothl1(conf_cm, conf_t, locp_4m, loc_t)   # (1, M) each

    # hard negative mining (data-dependent sort kept in XLA)
    pos = conf_t.reshape(B, D) > 0
    lc = jnp.where(pos, 0.0, ce.reshape(B, D))
    loss_idx = jnp.argsort(-lc, axis=1)
    idx_rank = jnp.argsort(loss_idx, axis=1)
    num_pos = jnp.sum(pos.astype(jnp.int32), axis=1, keepdims=True)
    num_neg = jnp.minimum(num_pos * negpos_ratio, D)
    neg = idx_rank < num_neg
    sel = jnp.logical_or(pos, neg)

    loss_l_sum, loss_c_sum, n_pos = masked_sums(
        sl1, ce,
        pos.reshape(1, M).astype(jnp.float32),
        sel.reshape(1, M).astype(jnp.float32))
    n = n_pos[0, 0]
    return loss_l_sum[0, 0] / n, loss_c_sum[0, 0] / n


# -----------------------------------------------------------------------------
# Pure-JAX reference (for correctness verification)
# -----------------------------------------------------------------------------
def _match_ref(truths, labels, dbox, threshold, variances=(0.1, 0.2)):
    T = truths.shape[0]
    dpt = jnp.concatenate([dbox[:, :2] - dbox[:, 2:] / 2,
                           dbox[:, :2] + dbox[:, 2:] / 2], axis=1)
    ix1 = jnp.maximum(truths[:, None, 0], dpt[None, :, 0])
    iy1 = jnp.maximum(truths[:, None, 1], dpt[None, :, 1])
    ix2 = jnp.minimum(truths[:, None, 2], dpt[None, :, 2])
    iy2 = jnp.minimum(truths[:, None, 3], dpt[None, :, 3])
    inter = jnp.maximum(ix2 - ix1, 0.0) * jnp.maximum(iy2 - iy1, 0.0)
    area_t = (truths[:, 2] - truths[:, 0]) * (truths[:, 3] - truths[:, 1])
    area_d = (dpt[:, 2] - dpt[:, 0]) * (dpt[:, 3] - dpt[:, 1])
    iou = inter / (area_t[:, None] + area_d[None, :] - inter)
    best_prior_idx = jnp.argmax(iou, axis=1)
    best_truth_ov = jnp.max(iou, axis=0)
    best_truth_idx = jnp.argmax(iou, axis=0)
    for j in range(T):
        best_truth_ov = best_truth_ov.at[best_prior_idx[j]].set(2.0)
        best_truth_idx = best_truth_idx.at[best_prior_idx[j]].set(j)
    matches = truths[best_truth_idx]
    conf = jnp.where(best_truth_ov < threshold, 0, labels[best_truth_idx] + 1)
    g_cxcy = ((matches[:, :2] + matches[:, 2:]) / 2 - dbox[:, :2]) / (variances[0] * dbox[:, 2:])
    g_wh = jnp.log((matches[:, 2:] - matches[:, :2]) / dbox[:, 2:]) / variances[1]
    return jnp.concatenate([g_cxcy, g_wh], axis=1), conf


def multibox_loss_ref(loc_data, conf_data, dbox_list, targets,
                      jaccard_thresh=0.5, negpos_ratio=3):
    B, D, C = conf_data.shape
    loc_t, conf_t = [], []
    for b in range(B):
        t = targets[b]
        lt, ct = _match_ref(t[:, :4].astype(jnp.float32),
                            t[:, 4].astype(jnp.int32), dbox_list, jaccard_thresh)
        loc_t.append(lt)
        conf_t.append(ct)
    loc_t = jnp.stack(loc_t)
    conf_t = jnp.stack(conf_t)
    pos = conf_t > 0
    d = loc_data - loc_t
    ad = jnp.abs(d)
    sl = jnp.where(ad < 1.0, 0.5 * d * d, ad - 0.5)
    loss_l = jnp.sum(sl * pos[..., None])
    logp = jax.nn.log_softmax(conf_data, axis=-1)
    ce = -jnp.take_along_axis(logp, conf_t[..., None], axis=-1)[..., 0]
    lc = jnp.where(pos, 0.0, ce)
    loss_idx = jnp.argsort(-lc, axis=1)
    idx_rank = jnp.argsort(loss_idx, axis=1)
    num_pos = jnp.sum(pos, axis=1, keepdims=True)
    num_neg = jnp.minimum(num_pos * negpos_ratio, D)
    neg = idx_rank < num_neg
    sel = jnp.logical_or(pos, neg)
    loss_c = jnp.sum(ce * sel)
    N = jnp.sum(num_pos).astype(jnp.float32)
    return loss_l / N, loss_c / N


# -----------------------------------------------------------------------------
if __name__ == "__main__":
    B, D, C, T = 2, 512, 21, 4      # small shapes: batch=2, 512 dboxes, 21 classes
    key = jax.random.PRNGKey(0)
    k1, k2, k3, k4, k5 = jax.random.split(key, 5)

    # default boxes (cx, cy, w, h) in [0, 1]
    cxcy = jax.random.uniform(k1, (D, 2), minval=0.05, maxval=0.95)
    wh = jax.random.uniform(k2, (D, 2), minval=0.08, maxval=0.45)
    dbox_list = jnp.concatenate([cxcy, wh], axis=1).astype(jnp.float32)

    # network predictions
    loc_data = 0.1 * jax.random.normal(k3, (B, D, 4), jnp.float32)
    conf_data = jax.random.normal(k4, (B, D, C), jnp.float32)

    # targets: T well-separated ground-truth boxes per image [x1,y1,x2,y2,label]
    centers = jnp.array([[0.25, 0.25], [0.75, 0.25],
                         [0.25, 0.75], [0.75, 0.75]], jnp.float32)
    tg = []
    for b in range(B):
        kb1, kb2, kb3 = jax.random.split(jax.random.fold_in(k5, b), 3)
        cts = centers[:T] + 0.04 * jax.random.normal(kb1, (T, 2))
        whs = jax.random.uniform(kb2, (T, 2), minval=0.15, maxval=0.35)
        x1y1 = jnp.clip(cts - whs / 2, 0.0, 0.95)
        x2y2 = jnp.clip(cts + whs / 2, x1y1 + 0.05, 1.0)
        lbl = jax.random.randint(kb3, (T, 1), 0, C - 1).astype(jnp.float32)
        tg.append(jnp.concatenate([x1y1, x2y2, lbl], axis=1).astype(jnp.float32))
    targets = tuple(tg)

    loss_fn = jax.jit(multibox_loss)
    loss_l, loss_c = loss_fn(loc_data, conf_data, dbox_list, targets)
    jax.block_until_ready((loss_l, loss_c))

    # verify against the pure-JAX reference
    ref_l, ref_c = jax.jit(multibox_loss_ref)(loc_data, conf_data, dbox_list, targets)
    assert bool(jnp.isfinite(loss_l)) and bool(jnp.isfinite(loss_c))
    assert abs(float(loss_l) - float(ref_l)) <= 1e-3 * max(1.0, abs(float(ref_l))), \
        (float(loss_l), float(ref_l))
    assert abs(float(loss_c) - float(ref_c)) <= 1e-3 * max(1.0, abs(float(ref_c))), \
        (float(loss_c), float(ref_c))

    print("KERNEL_OK")
</pallas_src>

<mosaic_0001>
module attributes {stable_mosaic.version = 11 : i64} {
  func.func @_ce_sl1_kernel(%arg0: i32, %arg1: memref<21x512xf32, #tpu.memory_space<vmem>>, %arg2: memref<1x512xi32, #tpu.memory_space<vmem>>, %arg3: memref<4x512xf32, #tpu.memory_space<vmem>>, %arg4: memref<4x512xf32, #tpu.memory_space<vmem>>, %arg5: memref<1x512xf32, #tpu.memory_space<vmem>>, %arg6: memref<1x512xf32, #tpu.memory_space<vmem>>) attributes {dimension_semantics = [#tpu.dimension_semantics<parallel>], iteration_bounds = array<i64: 2>, scalar_prefetch = 0 : i64, scratch_operands = 0 : i64, tpu.core_type = #tpu.core_type<tc>, window_params = [{transform_indices = @transform_0, window_bounds = array<i64: 21, 512>}, {transform_indices = @transform_1, window_bounds = array<i64: 1, 512>}, {transform_indices = @transform_2, window_bounds = array<i64: 4, 512>}, {transform_indices = @transform_3, window_bounds = array<i64: 4, 512>}, {transform_indices = @transform_4, window_bounds = array<i64: 1, 512>}, {transform_indices = @transform_5, window_bounds = array<i64: 1, 512>}]} {
    %c0 = arith.constant 0 : index
    %c0_0 = arith.constant 0 : index
    %0 = vector.load %arg1[%c0, %c0_0] : memref<21x512xf32, #tpu.memory_space<vmem>>, vector<21x512xf32>
    %c0_1 = arith.constant 0 : index
    %c0_2 = arith.constant 0 : index
    %1 = vector.load %arg2[%c0_1, %c0_2] : memref<1x512xi32, #tpu.memory_space<vmem>>, vector<1x512xi32>
    %cst = arith.constant dense<0xFF800000> : vector<512xf32>
    %2 = vector.multi_reduction <maximumf>, %0, %cst [0] : vector<21x512xf32> to vector<512xf32>
    %3 = vector.shape_cast %2 : vector<512xf32> to vector<1x512xf32>
    %4 = vector.broadcast %3 : vector<1x512xf32> to vector<21x512xf32>
    %5 = arith.subf %0, %4 : vector<21x512xf32>
    %6 = math.exp %5 : vector<21x512xf32>
    %cst_3 = arith.constant dense<0.000000e+00> : vector<512xf32>
    %7 = vector.multi_reduction <add>, %6, %cst_3 [0] : vector<21x512xf32> to vector<512xf32>
    %8 = vector.shape_cast %7 : vector<512xf32> to vector<1x512xf32>
    %9 = math.log %8 : vector<1x512xf32>
    %10 = arith.addf %3, %9 : vector<1x512xf32>
    %11 = tpu.iota {dimensions = array<i32: 0>} : vector<21x512xi32>
    %12 = vector.broadcast %1 : vector<1x512xi32> to vector<21x512xi32>
    %13 = arith.cmpi eq, %11, %12 : vector<21x512xi32>
    %14 = arith.extui %13 : vector<21x512xi1> to vector<21x512xi32>
    %15 = arith.sitofp %14 : vector<21x512xi32> to vector<21x512xf32>
    %16 = arith.mulf %0, %15 : vector<21x512xf32>
    %cst_4 = arith.constant dense<0.000000e+00> : vector<512xf32>
    %17 = vector.multi_reduction <add>, %16, %cst_4 [0] : vector<21x512xf32> to vector<512xf32>
    %18 = vector.shape_cast %17 : vector<512xf32> to vector<1x512xf32>
    %19 = arith.subf %10, %18 : vector<1x512xf32>
    %c0_5 = arith.constant 0 : index
    %c0_6 = arith.constant 0 : index
    %20 = vector.load %arg5[%c0_5, %c0_6] : memref<1x512xf32, #tpu.memory_space<vmem>>, vector<1x512xf32>
    tpu.vector_store %arg5[%c0_5, %c0_6], %19 {strides = array<i32>} : memref<1x512xf32, #tpu.memory_space<vmem>>, vector<1x512xf32>,
    %c0_7 = arith.constant 0 : index
    %c0_8 = arith.constant 0 : index
    %21 = vector.load %arg3[%c0_7, %c0_8] : memref<4x512xf32, #tpu.memory_space<vmem>>, vector<4x512xf32>
    %c0_9 = arith.constant 0 : index
    %c0_10 = arith.constant 0 : index
    %22 = vector.load %arg4[%c0_9, %c0_10] : memref<4x512xf32, #tpu.memory_space<vmem>>, vector<4x512xf32>
    %23 = arith.subf %21, %22 : vector<4x512xf32>
    %24 = math.absf %23 : vector<4x512xf32>
    %cst_11 = arith.constant 1.000000e+00 : f32
    %25 = vector.broadcast %cst_11 : f32 to vector<4x512xf32>
    %26 = arith.cmpf olt, %24, %25 : vector<4x512xf32>
    %cst_12 = arith.constant 5.000000e-01 : f32
    %27 = vector.broadcast %cst_12 : f32 to vector<4x512xf32>
    %28 = arith.mulf %27, %23 : vector<4x512xf32>
    %29 = arith.mulf %28, %23 : vector<4x512xf32>
    %cst_13 = arith.constant 5.000000e-01 : f32
    %30 = vector.broadcast %cst_13 : f32 to vector<4x512xf32>
    %31 = arith.subf %24, %30 : vector<4x512xf32>
    %32 = arith.select %26, %29, %31 : vector<4x512xi1>, vector<4x512xf32>
    %cst_14 = arith.constant dense<0.000000e+00> : vector<512xf32>
    %33 = vector.multi_reduction <add>, %32, %cst_14 [0] : vector<4x512xf32> to vector<512xf32>
    %34 = vector.shape_cast %33 : vector<512xf32> to vector<1x512xf32>
    %c0_15 = arith.constant 0 : index
    %c0_16 = arith.constant 0 : index
    %35 = vector.load %arg6[%c0_15, %c0_16] : memref<1x512xf32, #tpu.memory_space<vmem>>, vector<1x512xf32>
    tpu.vector_store %arg6[%c0_15, %c0_16], %34 {strides = array<i32>} : memref<1x512xf32, #tpu.memory_space<vmem>>, vector<1x512xf32>,
    return
  }
  func.func @transform_0(%arg0: i32) -> (i32, i32) {
    %c0_i32 = arith.constant 0 : i32
    %c0_i32_0 = arith.constant 0 : i32
    return %c0_i32, %arg0 : i32, i32
  }
  func.func @transform_1(%arg0: i32) -> (i32, i32) {
    %c0_i32 = arith.constant 0 : i32
    %c0_i32_0 = arith.constant 0 : i32
    return %c0_i32, %arg0 : i32, i32
  }
  func.func @transform_2(%arg0: i32) -> (i32, i32) {
    %c0_i32 = arith.constant 0 : i32
    %c0_i32_0 = arith.constant 0 : i32
    return %c0_i32, %arg0 : i32, i32
  }
  func.func @transform_3(%arg0: i32) -> (i32, i32) {
    %c0_i32 = arith.constant 0 : i32
    %c0_i32_0 = arith.constant 0 : i32
    return %c0_i32, %arg0 : i32, i32
  }
  func.func @transform_4(%arg0: i32) -> (i32, i32) {
    %c0_i32 = arith.constant 0 : i32
    %c0_i32_0 = arith.constant 0 : i32
    return %c0_i32, %arg0 : i32, i32
  }
  func.func @transform_5(%arg0: i32) -> (i32, i32) {
    %c0_i32 = arith.constant 0 : i32
    %c0_i32_0 = arith.constant 0 : i32
    return %c0_i32, %arg0 : i32, i32
  }
}

module attributes {stable_mosaic.version = 11 : i64} {
  func.func @_match_encode_kernel(%arg0: memref<4x4xf32, #tpu.memory_space<smem>>, %arg1: memref<4xi32, #tpu.memory_space<smem>>, %arg2: memref<4x512xf32, #tpu.memory_space<vmem>>, %arg3: memref<4x512xf32, #tpu.memory_space<vmem>>, %arg4: memref<4x512xf32, #tpu.memory_space<vmem>>, %arg5: memref<1x512xi32, #tpu.memory_space<vmem>>) attributes {dimension_semantics = [], scalar_prefetch = 0 : i64, scratch_operands = 0 : i64, tpu.core_type = #tpu.core_type<tc>} {
    %c0 = arith.constant 0 : index
    %c0_0 = arith.constant 0 : index
    %0 = vector.load %arg2[%c0, %c0_0] : memref<4x512xf32, #tpu.memory_space<vmem>>, vector<1x512xf32>
    %c1 = arith.constant 1 : index
    %c0_1 = arith.constant 0 : index
    %1 = vector.load %arg2[%c1, %c0_1] : memref<4x512xf32, #tpu.memory_space<vmem>>, vector<1x512xf32>
    %c2 = arith.constant 2 : index
    %c0_2 = arith.constant 0 : index
    %2 = vector.load %arg2[%c2, %c0_2] : memref<4x512xf32, #tpu.memory_space<vmem>>, vector<1x512xf32>
    %c3 = arith.constant 3 : index
    %c0_3 = arith.constant 0 : index
    %3 = vector.load %arg2[%c3, %c0_3] : memref<4x512xf32, #tpu.memory_space<vmem>>, vector<1x512xf32>
    %4 = arith.subf %2, %0 : vector<1x512xf32>
    %5 = arith.subf %3, %1 : vector<1x512xf32>
    %6 = arith.mulf %4, %5 : vector<1x512xf32>
    %7 = tpu.iota {dimensions = array<i32: 1>} : vector<1x512xi32>
    %cst = arith.constant -1.000000e+00 : f32
    %8 = vector.broadcast %cst : f32 to vector<1x512xf32>
    %c0_i32 = arith.constant 0 : i32
    %9 = vector.broadcast %c0_i32 : i32 to vector<1x512xi32>
    %c0_4 = arith.constant 0 : index
    %c0_5 = arith.constant 0 : index
    %10 = memref.load %arg0[%c0_4, %c0_5] : memref<4x4xf32, #tpu.memory_space<smem>>
    %c0_6 = arith.constant 0 : index
    %c1_7 = arith.constant 1 : index
    %11 = memref.load %arg0[%c0_6, %c1_7] : memref<4x4xf32, #tpu.memory_space<smem>>
    %c0_8 = arith.constant 0 : index
    %c2_9 = arith.constant 2 : index
    %12 = memref.load %arg0[%c0_8, %c2_9] : memref<4x4xf32, #tpu.memory_space<smem>>
    %c0_10 = arith.constant 0 : index
    %c3_11 = arith.constant 3 : index
    %13 = memref.load %arg0[%c0_10, %c3_11] : memref<4x4xf32, #tpu.memory_space<smem>>
    %14 = arith.subf %12, %10 : f32
    %15 = arith.subf %13, %11 : f32
    %16 = arith.mulf %14, %15 : f32
    %17 = vector.broadcast %10 : f32 to vector<1x512xf32>
    %18 = arith.maximumf %0, %17 : vector<1x512xf32>
    %19 = vector.broadcast %11 : f32 to vector<1x512xf32>
    %20 = arith.maximumf %1, %19 : vector<1x512xf32>
    %21 = vector.broadcast %12 : f32 to vector<1x512xf32>
    %22 = arith.minimumf %2, %21 : vector<1x512xf32>
    %23 = vector.broadcast %13 : f32 to vector<1x512xf32>
    %24 = arith.minimumf %3, %23 : vector<1x512xf32>
    %25 = arith.subf %22, %18 : vector<1x512xf32>
    %cst_12 = arith.constant 0.000000e+00 : f32
    %26 = vector.broadcast %cst_12 : f32 to vector<1x512xf32>
    %27 = arith.maximumf %25, %26 : vector<1x512xf32>
    %28 = arith.subf %24, %20 : vector<1x512xf32>
    %cst_13 = arith.constant 0.000000e+00 : f32
    %29 = vector.broadcast %cst_13 : f32 to vector<1x512xf32>
    %30 = arith.maximumf %28, %29 : vector<1x512xf32>
    %31 = arith.mulf %27, %30 : vector<1x512xf32>
    %32 = vector.broadcast %16 : f32 to vector<1x512xf32>
    %33 = arith.addf %6, %32 : vector<1x512xf32>
    %34 = arith.subf %33, %31 : vector<1x512xf32>
    %35 = arith.divf %31, %34 : vector<1x512xf32>
    %36 = arith.cmpf ogt, %35, %8 : vector<1x512xf32>
    %c0_i32_14 = arith.constant 0 : i32
    %37 = vector.broadcast %c0_i32_14 : i32 to vector<1x512xi32>
    %38 = arith.select %36, %37, %9 : vector<1x512xi1>, vector<1x512xi32>
    %39 = arith.select %36, %35, %8 : vector<1x512xi1>, vector<1x512xf32>
    %cst_15 = arith.constant dense<0xFF800000> : vector<1xf32>
    %40 = vector.multi_reduction <maximumf>, %35, %cst_15 [1] : vector<1x512xf32> to vector<1xf32>
    %41 = vector.shape_cast %40 : vector<1xf32> to vector<1x1xf32>
    %42 = vector.broadcast %41 : vector<1x1xf32> to vector<1x512xf32>
    %43 = arith.cmpf oge, %35, %42 : vector<1x512xf32>
    %c512_i32 = arith.constant 512 : i32
    %44 = vector.broadcast %c512_i32 : i32 to vector<1x512xi32>
    %45 = arith.select %43, %7, %44 : vector<1x512xi1>, vector<1x512xi32>
    %cst_16 = arith.constant dense<2147483647> : vector<1xi32>
    %46 = vector.multi_reduction <minsi>, %45, %cst_16 [1] : vector<1x512xi32> to vector<1xi32>
    %47 = vector.shape_cast %46 : vector<1xi32> to vector<1x1xi32>
    %c1_17 = arith.constant 1 : index
    %c0_18 = arith.constant 0 : index
    %48 = memref.load %arg0[%c1_17, %c0_18] : memref<4x4xf32, #tpu.memory_space<smem>>
    %c1_19 = arith.constant 1 : index
    %c1_20 = arith.constant 1 : index
    %49 = memref.load %arg0[%c1_19, %c1_20] : memref<4x4xf32, #tpu.memory_space<smem>>
    %c1_21 = arith.constant 1 : index
    %c2_22 = arith.constant 2 : index
    %50 = memref.load %arg0[%c1_21, %c2_22] : memref<4x4xf32, #tpu.memory_space<smem>>
    %c1_23 = arith.constant 1 : index
    %c3_24 = arith.constant 3 : index
    %51 = memref.load %arg0[%c1_23, %c3_24] : memref<4x4xf32, #tpu.memory_space<smem>>
    %52 = arith.subf %50, %48 : f32
    %53 = arith.subf %51, %49 : f32
    %54 = arith.mulf %52, %53 : f32
    %55 = vector.broadcast %48 : f32 to vector<1x512xf32>
    %56 = arith.maximumf %0, %55 : vector<1x512xf32>
    %57 = vector.broadcast %49 : f32 to vector<1x512xf32>
    %58 = arith.maximumf %1, %57 : vector<1x512xf32>
    %59 = vector.broadcast %50 : f32 to vector<1x512xf32>
    %60 = arith.minimumf %2, %59 : vector<1x512xf32>
    %61 = vector.broadcast %51 : f32 to vector<1x512xf32>
    %62 = arith.minimumf %3, %61 : vector<1x512xf32>
    %63 = arith.subf %60, %56 : vector<1x512xf32>
    %cst_25 = arith.constant 0.000000e+00 : f32
    %64 = vector.broadcast %cst_25 : f32 to vector<1x512xf32>
    %65 = arith.maximumf %63, %64 : vector<1x512xf32>
    %66 = arith.subf %62, %58 : vector<1x512xf32>
    %cst_26 = arith.constant 0.000000e+00 : f32
    %67 = vector.broadcast %cst_26 : f32 to vector<1x512xf32>
    %68 = arith.maximumf %66, %67 : vector<1x512xf32>
    %69 = arith.mulf %65, %68 : vector<1x512xf32>
    %70 = vector.broadcast %54 : f32 to vector<1x512xf32>
    %71 = arith.addf %6, %70 : vector<1x512xf32>
    %72 = arith.subf %71, %69 : vector<1x512xf32>
    %73 = arith.divf %69, %72 : vector<1x512xf32>
    %74 = arith.cmpf ogt, %73, %39 : vector<1x512xf32>
    %c1_i32 = arith.constant 1 : i32
    %75 = vector.broadcast %c1_i32 : i32 to vector<1x512xi32>
    %76 = arith.select %74, %75, %38 : vector<1x512xi1>, vector<1x512xi32>
    %77 = arith.select %74, %73, %39 : vector<1x512xi1>, vector<1x512xf32>
    %cst_27 = arith.constant dense<0xFF800000> : vector<1xf32>
    %78 = vector.multi_reduction <maximumf>, %73, %cst_27 [1] : vector<1x512xf32> to vector<1xf32>
    %79 = vector.shape_cast %78 : vector<1xf32> to vector<1x1xf32>
    %80 = vector.broadcast %79 : vector<1x1xf32> to vector<1x512xf32>
    %81 = arith.cmpf oge, %73, %80 : vector<1x512xf32>
    %c512_i32_28 = arith.constant 512 : i32
    %82 = vector.broadcast %c512_i32_28 : i32 to vector<1x512xi32>
    %83 = arith.select %81, %7, %82 : vector<1x512xi1>, vector<1x512xi32>
    %cst_29 = arith.constant dense<2147483647> : vector<1xi32>
    %84 = vector.multi_reduction <minsi>, %83, %cst_29 [1] : vector<1x512xi32> to vector<1xi32>
    %85 = vector.shape_cast %84 : vector<1xi32> to vector<1x1xi32>
    %c2_30 = arith.constant 2 : index
    %c0_31 = arith.constant 0 : index
    %86 = memref.load %arg0[%c2_30, %c0_31] : memref<4x4xf32, #tpu.memory_space<smem>>
    %c2_32 = arith.constant 2 : index
    %c1_33 = arith.constant 1 : index
    %87 = memref.load %arg0[%c2_32, %c1_33] : memref<4x4xf32, #tpu.memory_space<smem>>
    %c2_34 = arith.constant 2 : index
    %c2_35 = arith.constant 2 : index
    %88 = memref.load %arg0[%c2_34, %c2_35] : memref<4x4xf32, #tpu.memory_space<smem>>
    %c2_36 = arith.constant 2 : index
    %c3_37 = arith.constant 3 : index
    %89 = memref.load %arg0[%c2_36, %c3_37] : memref<4x4xf32, #tpu.memory_space<smem>>
    %90 = arith.subf %88, %86 : f32
    %91 = arith.subf %89, %87 : f32
    %92 = arith.mulf %90, %91 : f32
    %93 = vector.broadcast %86 : f32 to vector<1x512xf32>
    %94 = arith.maximumf %0, %93 : vector<1x512xf32>
    %95 = vector.broadcast %87 : f32 to vector<1x512xf32>
    %96 = arith.maximumf %1, %95 : vector<1x512xf32>
    %97 = vector.broadcast %88 : f32 to vector<1x512xf32>
    %98 = arith.minimumf %2, %97 : vector<1x512xf32>
    %99 = vector.broadcast %89 : f32 to vector<1x512xf32>
    %100 = arith.minimumf %3, %99 : vector<1x512xf32>
    %101 = arith.subf %98, %94 : vector<1x512xf32>
    %cst_38 = arith.constant 0.000000e+00 : f32
    %102 = vector.broadcast %cst_38 : f32 to vector<1x512xf32>
    %103 = arith.maximumf %101, %102 : vector<1x512xf32>
    %104 = arith.subf %100, %96 : vector<1x512xf32>
    %cst_39 = arith.constant 0.000000e+00 : f32
    %105 = vector.broadcast %cst_39 : f32 to vector<1x512xf32>
    %106 = arith.maximumf %104, %105 : vector<1x512xf32>
    %107 = arith.mulf %103, %106 : vector<1x512xf32>
    %108 = vector.broadcast %92 : f32 to vector<1x512xf32>
    %109 = arith.addf %6, %108 : vector<1x512xf32>
    %110 = arith.subf %109, %107 : vector<1x512xf32>
    %111 = arith.divf %107, %110 : vector<1x512xf32>
    %112 = arith.cmpf ogt, %111, %77 : vector<1x512xf32>
    %c2_i32 = arith.constant 2 : i32
    %113 = vector.broadcast %c2_i32 : i32 to vector<1x512xi32>
    %114 = arith.select %112, %113, %76 : vector<1x512xi1>, vector<1x512xi32>
    %115 = arith.select %112, %111, %77 : vector<1x512xi1>, vector<1x512xf32>
    %cst_40 = arith.constant dense<0xFF800000> : vector<1xf32>
    %116 = vector.multi_reduction <maximumf>, %111, %cst_40 [1] : vector<1x512xf32> to vector<1xf32>
    %117 = vector.shape_cast %116 : vector<1xf32> to vector<1x1xf32>
    %118 = vector.broadcast %117 : vector<1x1xf32> to vector<1x512xf32>
    %119 = arith.cmpf oge, %111, %118 : vector<1x512xf32>
    %c512_i32_41 = arith.constant 512 : i32
    %120 = vector.broadcast %c512_i32_41 : i32 to vector<1x512xi32>
    %121 = arith.select %119, %7, %120 : vector<1x512xi1>, vector<1x512xi32>
    %cst_42 = arith.constant dense<2147483647> : vector<1xi32>
    %122 = vector.multi_reduction <minsi>, %121, %cst_42 [1] : vector<1x512xi32> to vector<1xi32>
    %123 = vector.shape_cast %122 : vector<1xi32> to vector<1x1xi32>
    %c3_43 = arith.constant 3 : index
    %c0_44 = arith.constant 0 : index
    %124 = memref.load %arg0[%c3_43, %c0_44] : memref<4x4xf32, #tpu.memory_space<smem>>
    %c3_45 = arith.constant 3 : index
    %c1_46 = arith.constant 1 : index
    %125 = memref.load %arg0[%c3_45, %c1_46] : memref<4x4xf32, #tpu.memory_space<smem>>
    %c3_47 = arith.constant 3 : index
    %c2_48 = arith.constant 2 : index
    %126 = memref.load %arg0[%c3_47, %c2_48] : memref<4x4xf32, #tpu.memory_space<smem>>
    %c3_49 = arith.constant 3 : index
    %c3_50 = arith.constant 3 : index
    %127 = memref.load %arg0[%c3_49, %c3_50] : memref<4x4xf32, #tpu.memory_space<smem>>
    %128 = arith.subf %126, %124 : f32
    %129 = arith.subf %127, %125 : f32
    %130 = arith.mulf %128, %129 : f32
    %131 = vector.broadcast %124 : f32 to vector<1x512xf32>
    %132 = arith.maximumf %0, %131 : vector<1x512xf32>
    %133 = vector.broadcast %125 : f32 to vector<1x512xf32>
    %134 = arith.maximumf %1, %133 : vector<1x512xf32>
    %135 = vector.broadcast %126 : f32 to vector<1x512xf32>
    %136 = arith.minimumf %2, %135 : vector<1x512xf32>
    %137 = vector.broadcast %127 : f32 to vector<1x512xf32>
    %138 = arith.minimumf %3, %137 : vector<1x512xf32>
    %139 = arith.subf %136, %132 : vector<1x512xf32>
    %cst_51 = arith.constant 0.000000e+00 : f32
    %140 = vector.broadcast %cst_51 : f32 to vector<1x512xf32>
    %141 = arith.maximumf %139, %140 : vector<1x512xf32>
    %142 = arith.subf %138, %134 : vector<1x512xf32>
    %cst_52 = arith.constant 0.000000e+00 : f32
    %143 = vector.broadcast %cst_52 : f32 to vector<1x512xf32>
    %144 = arith.maximumf %142, %143 : vector<1x512xf32>
    %145 = arith.mulf %141, %144 : vector<1x512xf32>
    %146 = vector.broadcast %130 : f32 to vector<1x512xf32>
    %147 = arith.addf %6, %146 : vector<1x512xf32>
    %148 = arith.subf %147, %145 : vector<1x512xf32>
    %149 = arith.divf %145, %148 : vector<1x512xf32>
    %150 = arith.cmpf ogt, %149, %115 : vector<1x512xf32>
    %c3_i32 = arith.constant 3 : i32
    %151 = vector.broadcast %c3_i32 : i32 to vector<1x512xi32>
    %152 = arith.select %150, %151, %114 : vector<1x512xi1>, vector<1x512xi32>
    %153 = arith.select %150, %149, %115 : vector<1x512xi1>, vector<1x512xf32>
    %cst_53 = arith.constant dense<0xFF800000> : vector<1xf32>
    %154 = vector.multi_reduction <maximumf>, %149, %cst_53 [1] : vector<1x512xf32> to vector<1xf32>
    %155 = vector.shape_cast %154 : vector<1xf32> to vector<1x1xf32>
    %156 = vector.broadcast %155 : vector<1x1xf32> to vector<1x512xf32>
    %157 = arith.cmpf oge, %149, %156 : vector<1x512xf32>
    %c512_i32_54 = arith.constant 512 : i32
    %158 = vector.broadcast %c512_i32_54 : i32 to vector<1x512xi32>
    %159 = arith.select %157, %7, %158 : vector<1x512xi1>, vector<1x512xi32>
    %cst_55 = arith.constant dense<2147483647> : vector<1xi32>
    %160 = vector.multi_reduction <minsi>, %159, %cst_55 [1] : vector<1x512xi32> to vector<1xi32>
    %161 = vector.shape_cast %160 : vector<1xi32> to vector<1x1xi32>
    %162 = vector.broadcast %47 : vector<1x1xi32> to vector<1x512xi32>
    %163 = arith.cmpi eq, %7, %162 : vector<1x512xi32>
    %cst_56 = arith.constant 2.000000e+00 : f32
    %164 = vector.broadcast %cst_56 : f32 to vector<1x512xf32>
    %165 = arith.select %163, %164, %153 : vector<1x512xi1>, vector<1x512xf32>
    %c0_i32_57 = arith.constant 0 : i32
    %166 = vector.broadcast %c0_i32_57 : i32 to vector<1x512xi32>
    %167 = arith.select %163, %166, %152 : vector<1x512xi1>, vector<1x512xi32>
    %168 = vector.broadcast %85 : vector<1x1xi32> to vector<1x512xi32>
    %169 = arith.cmpi eq, %7, %168 : vector<1x512xi32>
    %cst_58 = arith.constant 2.000000e+00 : f32
    %170 = vector.broadcast %cst_58 : f32 to vector<1x512xf32>
    %171 = arith.select %169, %170, %165 : vector<1x512xi1>, vector<1x512xf32>
    %c1_i32_59 = arith.constant 1 : i32
    %172 = vector.broadcast %c1_i32_59 : i32 to vector<1x512xi32>
    %173 = arith.select %169, %172, %167 : vector<1x512xi1>, vector<1x512xi32>
    %174 = vector.broadcast %123 : vector<1x1xi32> to vector<1x512xi32>
    %175 = arith.cmpi eq, %7, %174 : vector<1x512xi32>
    %cst_60 = arith.constant 2.000000e+00 : f32
    %176 = vector.broadcast %cst_60 : f32 to vector<1x512xf32>
    %177 = arith.select %175, %176, %171 : vector<1x512xi1>, vector<1x512xf32>
    %c2_i32_61 = arith.constant 2 : i32
    %178 = vector.broadcast %c2_i32_61 : i32 to vector<1x512xi32>
    %179 = arith.select %175, %178, %173 : vector<1x512xi1>, vector<1x512xi32>
    %180 = vector.broadcast %161 : vector<1x1xi32> to vector<1x512xi32>
    %181 = arith.cmpi eq, %7, %180 : vector<1x512xi32>
    %cst_62 = arith.constant 2.000000e+00 : f32
    %182 = vector.broadcast %cst_62 : f32 to vector<1x512xf32>
    %183 = arith.select %181, %182, %177 : vector<1x512xi1>, vector<1x512xf32>
    %c3_i32_63 = arith.constant 3 : i32
    %184 = vector.broadcast %c3_i32_63 : i32 to vector<1x512xi32>
    %185 = arith.select %181, %184, %179 : vector<1x512xi1>, vector<1x512xi32>
    %cst_64 = arith.constant 0.000000e+00 : f32
    %186 = vector.broadcast %cst_64 : f32 to vector<1x512xf32>
    %cst_65 = arith.constant 0.000000e+00 : f32
    %187 = vector.broadcast %cst_65 : f32 to vector<1x512xf32>
    %cst_66 = arith.constant 0.000000e+00 : f32
    %188 = vector.broadcast %cst_66 : f32 to vector<1x512xf32>
    %cst_67 = arith.constant 0.000000e+00 : f32
    %189 = vector.broadcast %cst_67 : f32 to vector<1x512xf32>
    %c0_i32_68 = arith.constant 0 : i32
    %190 = vector.broadcast %c0_i32_68 : i32 to vector<1x512xi32>
    %c0_i32_69 = arith.constant 0 : i32
    %191 = vector.broadcast %c0_i32_69 : i32 to vector<1x512xi32>
    %192 = arith.cmpi eq, %185, %191 : vector<1x512xi32>
    %c0_70 = arith.constant 0 : index
    %c0_71 = arith.constant 0 : index
    %193 = memref.load %arg0[%c0_70, %c0_71] : memref<4x4xf32, #tpu.memory_space<smem>>
    %194 = vector.broadcast %193 : f32 to vector<1x512xf32>
    %195 = arith.select %192, %194, %186 : vector<1x512xi1>, vector<1x512xf32>
    %c0_72 = arith.constant 0 : index
    %c1_73 = arith.constant 1 : index
    %196 = memref.load %arg0[%c0_72, %c1_73] : memref<4x4xf32, #tpu.memory_space<smem>>
    %197 = vector.broadcast %196 : f32 to vector<1x512xf32>
    %198 = arith.select %192, %197, %187 : vector<1x512xi1>, vector<1x512xf32>
    %c0_74 = arith.constant 0 : index
    %c2_75 = arith.constant 2 : index
    %199 = memref.load %arg0[%c0_74, %c2_75] : memref<4x4xf32, #tpu.memory_space<smem>>
    %200 = vector.broadcast %199 : f32 to vector<1x512xf32>
    %201 = arith.select %192, %200, %188 : vector<1x512xi1>, vector<1x512xf32>
    %c0_76 = arith.constant 0 : index
    %c3_77 = arith.constant 3 : index
    %202 = memref.load %arg0[%c0_76, %c3_77] : memref<4x4xf32, #tpu.memory_space<smem>>
    %203 = vector.broadcast %202 : f32 to vector<1x512xf32>
    %204 = arith.select %192, %203, %189 : vector<1x512xi1>, vector<1x512xf32>
    %c0_78 = arith.constant 0 : index
    %205 = memref.load %arg1[%c0_78] : memref<4xi32, #tpu.memory_space<smem>>
    %c1_i32_79 = arith.constant 1 : i32
    %206 = arith.addi %205, %c1_i32_79 : i32
    %207 = vector.broadcast %206 : i32 to vector<1x512xi32>
    %208 = arith.select %192, %207, %190 : vector<1x512xi1>, vector<1x512xi32>
    %c1_i32_80 = arith.constant 1 : i32
    %209 = vector.broadcast %c1_i32_80 : i32 to vector<1x512xi32>
    %210 = arith.cmpi eq, %185, %209 : vector<1x512xi32>
    %c1_81 = arith.constant 1 : index
    %c0_82 = arith.constant 0 : index
    %211 = memref.load %arg0[%c1_81, %c0_82] : memref<4x4xf32, #tpu.memory_space<smem>>
    %212 = vector.broadcast %211 : f32 to vector<1x512xf32>
    %213 = arith.select %210, %212, %195 : vector<1x512xi1>, vector<1x512xf32>
    %c1_83 = arith.constant 1 : index
    %c1_84 = arith.constant 1 : index
    %214 = memref.load %arg0[%c1_83, %c1_84] : memref<4x4xf32, #tpu.memory_space<smem>>
    %215 = vector.broadcast %214 : f32 to vector<1x512xf32>
    %216 = arith.select %210, %215, %198 : vector<1x512xi1>, vector<1x512xf32>
    %c1_85 = arith.constant 1 : index
    %c2_86 = arith.constant 2 : index
    %217 = memref.load %arg0[%c1_85, %c2_86] : memref<4x4xf32, #tpu.memory_space<smem>>
    %218 = vector.broadcast %217 : f32 to vector<1x512xf32>
    %219 = arith.select %210, %218, %201 : vector<1x512xi1>, vector<1x512xf32>
    %c1_87 = arith.constant 1 : index
    %c3_88 = arith.constant 3 : index
    %220 = memref.load %arg0[%c1_87, %c3_88] : memref<4x4xf32, #tpu.memory_space<smem>>
    %221 = vector.broadcast %220 : f32 to vector<1x512xf32>
    %222 = arith.select %210, %221, %204 : vector<1x512xi1>, vector<1x512xf32>
    %c1_89 = arith.constant 1 : index
    %223 = memref.load %arg1[%c1_89] : memref<4xi32, #tpu.memory_space<smem>>
    %c1_i32_90 = arith.constant 1 : i32
    %224 = arith.addi %223, %c1_i32_90 : i32
    %225 = vector.broadcast %224 : i32 to vector<1x512xi32>
    %226 = arith.select %210, %225, %208 : vector<1x512xi1>, vector<1x512xi32>
    %c2_i32_91 = arith.constant 2 : i32
    %227 = vector.broadcast %c2_i32_91 : i32 to vector<1x512xi32>
    %228 = arith.cmpi eq, %185, %227 : vector<1x512xi32>
    %c2_92 = arith.constant 2 : index
    %c0_93 = arith.constant 0 : index
    %229 = memref.load %arg0[%c2_92, %c0_93] : memref<4x4xf32, #tpu.memory_space<smem>>
    %230 = vector.broadcast %229 : f32 to vector<1x512xf32>
    %231 = arith.select %228, %230, %213 : vector<1x512xi1>, vector<1x512xf32>
    %c2_94 = arith.constant 2 : index
    %c1_95 = arith.constant 1 : index
    %232 = memref.load %arg0[%c2_94, %c1_95] : memref<4x4xf32, #tpu.memory_space<smem>>
    %233 = vector.broadcast %232 : f32 to vector<1x512xf32>
    %234 = arith.select %228, %233, %216 : vector<1x512xi1>, vector<1x512xf32>
    %c2_96 = arith.constant 2 : index
    %c2_97 = arith.constant 2 : index
    %235 = memref.load %arg0[%c2_96, %c2_97] : memref<4x4xf32, #tpu.memory_space<smem>>
    %236 = vector.broadcast %235 : f32 to vector<1x512xf32>
    %237 = arith.select %228, %236, %219 : vector<1x512xi1>, vector<1x512xf32>
    %c2_98 = arith.constant 2 : index
    %c3_99 = arith.constant 3 : index
    %238 = memref.load %arg0[%c2_98, %c3_99] : memref<4x4xf32, #tpu.memory_space<smem>>
    %239 = vector.broadcast %238 : f32 to vector<1x512xf32>
    %240 = arith.select %228, %239, %222 : vector<1x512xi1>, vector<1x512xf32>
    %c2_100 = arith.constant 2 : index
    %241 = memref.load %arg1[%c2_100] : memref<4xi32, #tpu.memory_space<smem>>
    %c1_i32_101 = arith.constant 1 : i32
    %242 = arith.addi %241, %c1_i32_101 : i32
    %243 = vector.broadcast %242 : i32 to vector<1x512xi32>
    %244 = arith.select %228, %243, %226 : vector<1x512xi1>, vector<1x512xi32>
    %c3_i32_102 = arith.constant 3 : i32
    %245 = vector.broadcast %c3_i32_102 : i32 to vector<1x512xi32>
    %246 = arith.cmpi eq, %185, %245 : vector<1x512xi32>
    %c3_103 = arith.constant 3 : index
    %c0_104 = arith.constant 0 : index
    %247 = memref.load %arg0[%c3_103, %c0_104] : memref<4x4xf32, #tpu.memory_space<smem>>
    %248 = vector.broadcast %247 : f32 to vector<1x512xf32>
    %249 = arith.select %246, %248, %231 : vector<1x512xi1>, vector<1x512xf32>
    %c3_105 = arith.constant 3 : index
    %c1_106 = arith.constant 1 : index
    %250 = memref.load %arg0[%c3_105, %c1_106] : memref<4x4xf32, #tpu.memory_space<smem>>
    %251 = vector.broadcast %250 : f32 to vector<1x512xf32>
    %252 = arith.select %246, %251, %234 : vector<1x512xi1>, vector<1x512xf32>
    %c3_107 = arith.constant 3 : index
    %c2_108 = arith.constant 2 : index
    %253 = memref.load %arg0[%c3_107, %c2_108] : memref<4x4xf32, #tpu.memory_space<smem>>
    %254 = vector.broadcast %253 : f32 to vector<1x512xf32>
    %255 = arith.select %246, %254, %237 : vector<1x512xi1>, vector<1x512xf32>
    %c3_109 = arith.constant 3 : index
    %c3_110 = arith.constant 3 : index
    %256 = memref.load %arg0[%c3_109, %c3_110] : memref<4x4xf32, #tpu.memory_space<smem>>
    %257 = vector.broadcast %256 : f32 to vector<1x512xf32>
    %258 = arith.select %246, %257, %240 : vector<1x512xi1>, vector<1x512xf32>
    %c3_111 = arith.constant 3 : index
    %259 = memref.load %arg1[%c3_111] : memref<4xi32, #tpu.memory_space<smem>>
    %c1_i32_112 = arith.constant 1 : i32
    %260 = arith.addi %259, %c1_i32_112 : i32
    %261 = vector.broadcast %260 : i32 to vector<1x512xi32>
    %262 = arith.select %246, %261, %244 : vector<1x512xi1>, vector<1x512xi32>
    %cst_113 = arith.constant 5.000000e-01 : f32
    %263 = vector.broadcast %cst_113 : f32 to vector<1x512xf32>
    %264 = arith.cmpf olt, %183, %263 : vector<1x512xf32>
    %c0_i32_114 = arith.constant 0 : i32
    %265 = vector.broadcast %c0_i32_114 : i32 to vector<1x512xi32>
    %266 = arith.select %264, %265, %262 : vector<1x512xi1>, vector<1x512xi32>
    %c0_115 = arith.constant 0 : index
    %c0_116 = arith.constant 0 : index
    %267 = vector.load %arg5[%c0_115, %c0_116] : memref<1x512xi32, #tpu.memory_space<vmem>>, vector<1x512xi32>
    tpu.vector_store %arg5[%c0_115, %c0_116], %266 {strides = array<i32>} : memref<1x512xi32, #tpu.memory_space<vmem>>, vector<1x512xi32>,
    %c0_117 = arith.constant 0 : index
    %c0_118 = arith.constant 0 : index
    %268 = vector.load %arg3[%c0_117, %c0_118] : memref<4x512xf32, #tpu.memory_space<vmem>>, vector<1x512xf32>
    %c1_119 = arith.constant 1 : index
    %c0_120 = arith.constant 0 : index
    %269 = vector.load %arg3[%c1_119, %c0_120] : memref<4x512xf32, #tpu.memory_space<vmem>>, vector<1x512xf32>
    %c2_121 = arith.constant 2 : index
    %c0_122 = arith.constant 0 : index
    %270 = vector.load %arg3[%c2_121, %c0_122] : memref<4x512xf32, #tpu.memory_space<vmem>>, vector<1x512xf32>
    %c3_123 = arith.constant 3 : index
    %c0_124 = arith.constant 0 : index
    %271 = vector.load %arg3[%c3_123, %c0_124] : memref<4x512xf32, #tpu.memory_space<vmem>>, vector<1x512xf32>
    %272 = arith.addf %249, %255 : vector<1x512xf32>
    %cst_125 = arith.constant 5.000000e-01 : f32
    %273 = vector.broadcast %cst_125 : f32 to vector<1x512xf32>
    %274 = arith.mulf %272, %273 : vector<1x512xf32>
    %275 = arith.subf %274, %268 : vector<1x512xf32>
    %cst_126 = arith.constant 1.000000e-01 : f32
    %276 = vector.broadcast %cst_126 : f32 to vector<1x512xf32>
    %277 = arith.mulf %276, %270 : vector<1x512xf32>
    %278 = arith.divf %275, %277 : vector<1x512xf32>
    %c0_127 = arith.constant 0 : index
    %c0_128 = arith.constant 0 : index
    %279 = vector.load %arg4[%c0_127, %c0_128] : memref<4x512xf32, #tpu.memory_space<vmem>>, vector<1x512xf32>
    tpu.vector_store %arg4[%c0_127, %c0_128], %278 {strides = array<i32>} : memref<4x512xf32, #tpu.memory_space<vmem>>, vector<1x512xf32>,
    %280 = arith.addf %252, %258 : vector<1x512xf32>
    %cst_129 = arith.constant 5.000000e-01 : f32
    %281 = vector.broadcast %cst_129 : f32 to vector<1x512xf32>
    %282 = arith.mulf %280, %281 : vector<1x512xf32>
    %283 = arith.subf %282, %269 : vector<1x512xf32>
    %cst_130 = arith.constant 1.000000e-01 : f32
    %284 = vector.broadcast %cst_130 : f32 to vector<1x512xf32>
    %285 = arith.mulf %284, %271 : vector<1x512xf32>
    %286 = arith.divf %283, %285 : vector<1x512xf32>
    %c1_131 = arith.constant 1 : index
    %c0_132 = arith.constant 0 : index
    %287 = vector.load %arg4[%c1_131, %c0_132] : memref<4x512xf32, #tpu.memory_space<vmem>>, vector<1x512xf32>
    tpu.vector_store %arg4[%c1_131, %c0_132], %286 {strides = array<i32>} : memref<4x512xf32, #tpu.memory_space<vmem>>, vector<1x512xf32>,
    %288 = arith.subf %255, %249 : vector<1x512xf32>
    %289 = arith.divf %288, %270 : vector<1x512xf32>
    %290 = math.log %289 : vector<1x512xf32>
    %cst_133 = arith.constant 2.000000e-01 : f32
    %291 = vector.broadcast %cst_133 : f32 to vector<1x512xf32>
    %292 = arith.divf %290, %291 : vector<1x512xf32>
    %c2_134 = arith.constant 2 : index
    %c0_135 = arith.constant 0 : index
    %293 = vector.load %arg4[%c2_134, %c0_135] : memref<4x512xf32, #tpu.memory_space<vmem>>, vector<1x512xf32>
    tpu.vector_store %arg4[%c2_134, %c0_135], %292 {strides = array<i32>} : memref<4x512xf32, #tpu.memory_space<vmem>>, vector<1x512xf32>,
    %294 = arith.subf %258, %252 : vector<1x512xf32>
    %295 = arith.divf %294, %271 : vector<1x512xf32>
    %296 = math.log %295 : vector<1x512xf32>
    %cst_136 = arith.constant 2.000000e-01 : f32
    %297 = vector.broadcast %cst_136 : f32 to vector<1x512xf32>
    %298 = arith.divf %296, %297 : vector<1x512xf32>
    %c3_137 = arith.constant 3 : index
    %c0_138 = arith.constant 0 : index
    %299 = vector.load %arg4[%c3_137, %c0_138] : memref<4x512xf32, #tpu.memory_space<vmem>>, vector<1x512xf32>
    tpu.vector_store %arg4[%c3_137, %c0_138], %298 {strides = array<i32>} : memref<4x512xf32, #tpu.memory_space<vmem>>, vector<1x512xf32>,
    return
  }
}

module attributes {stable_mosaic.version = 11 : i64} {
  func.func @_masked_sum_kernel(%arg0: memref<1x1024xf32, #tpu.memory_space<vmem>>, %arg1: memref<1x1024xf32, #tpu.memory_space<vmem>>, %arg2: memref<1x1024xf32, #tpu.memory_space<vmem>>, %arg3: memref<1x1024xf32, #tpu.memory_space<vmem>>, %arg4: memref<1x1xf32, #tpu.memory_space<vmem>>, %arg5: memref<1x1xf32, #tpu.memory_space<vmem>>, %arg6: memref<1x1xf32, #tpu.memory_space<vmem>>) attributes {dimension_semantics = [], scalar_prefetch = 0 : i64, scratch_operands = 0 : i64, tpu.core_type = #tpu.core_type<tc>} {
    %c0 = arith.constant 0 : index
    %c0_0 = arith.constant 0 : index
    %0 = vector.load %arg2[%c0, %c0_0] : memref<1x1024xf32, #tpu.memory_space<vmem>>, vector<1x1024xf32>
    %c0_1 = arith.constant 0 : index
    %c0_2 = arith.constant 0 : index
    %1 = vector.load %arg0[%c0_1, %c0_2] : memref<1x1024xf32, #tpu.memory_space<vmem>>, vector<1x1024xf32>
    %2 = arith.mulf %1, %0 : vector<1x1024xf32>
    %cst = arith.constant dense<0.000000e+00> : vector<1xf32>
    %3 = vector.multi_reduction <add>, %2, %cst [1] : vector<1x1024xf32> to vector<1xf32>
    %4 = vector.shape_cast %3 : vector<1xf32> to vector<1x1xf32>
    %c0_3 = arith.constant 0 : index
    %c0_4 = arith.constant 0 : index
    %5 = vector.load %arg4[%c0_3, %c0_4] : memref<1x1xf32, #tpu.memory_space<vmem>>, vector<1x1xf32>
    tpu.vector_store %arg4[%c0_3, %c0_4], %4 {strides = array<i32>} : memref<1x1xf32, #tpu.memory_space<vmem>>, vector<1x1xf32>,
    %c0_5 = arith.constant 0 : index
    %c0_6 = arith.constant 0 : index
    %6 = vector.load %arg1[%c0_5, %c0_6] : memref<1x1024xf32, #tpu.memory_space<vmem>>, vector<1x1024xf32>
    %c0_7 = arith.constant 0 : index
    %c0_8 = arith.constant 0 : index
    %7 = vector.load %arg3[%c0_7, %c0_8] : memref<1x1024xf32, #tpu.memory_space<vmem>>, vector<1x1024xf32>
    %8 = arith.mulf %6, %7 : vector<1x1024xf32>
    %cst_9 = arith.constant dense<0.000000e+00> : vector<1xf32>
    %9 = vector.multi_reduction <add>, %8, %cst_9 [1] : vector<1x1024xf32> to vector<1xf32>
    %10 = vector.shape_cast %9 : vector<1xf32> to vector<1x1xf32>
    %c0_10 = arith.constant 0 : index
    %c0_11 = arith.constant 0 : index
    %11 = vector.load %arg5[%c0_10, %c0_11] : memref<1x1xf32, #tpu.memory_space<vmem>>, vector<1x1xf32>
    tpu.vector_store %arg5[%c0_10, %c0_11], %10 {strides = array<i32>} : memref<1x1xf32, #tpu.memory_space<vmem>>, vector<1x1xf32>,
    %cst_12 = arith.constant dense<0.000000e+00> : vector<1xf32>
    %12 = vector.multi_reduction <add>, %0, %cst_12 [1] : vector<1x1024xf32> to vector<1xf32>
    %13 = vector.shape_cast %12 : vector<1xf32> to vector<1x1xf32>
    %c0_13 = arith.constant 0 : index
    %c0_14 = arith.constant 0 : index
    %14 = vector.load %arg6[%c0_13, %c0_14] : memref<1x1xf32, #tpu.memory_space<vmem>>, vector<1x1xf32>
    tpu.vector_store %arg6[%c0_13, %c0_14], %13 {strides = array<i32>} : memref<1x1xf32, #tpu.memory_space<vmem>>, vector<1x1xf32>,
    return
  }
}

</mosaic_0001>

<llo_original>
// kernel: multibox_loss.6
$region0: #{multibox_loss.6}
  #allocation0 [shape = 'u32[]', space=smem, size = 0x4, offset = 0x4, fixed_abs, tag = 'smem constant byte address 0x4 - core index']
  #allocation1 [shape = 'u32[144,128]{1,0:T(1,128)}', space=vmem, size = 0x12000, scoped, tag = 'internal scratch']
  %s0 = inlined_call_operand.vmem [shape: f32[21,1024], index: 0, kind: input, shape index: {}]
  %s1 = inlined_call_operand.vmem [shape: s32[1,1024], index: 1, kind: input, shape index: {}]
  %s2 = inlined_call_operand.vmem [shape: f32[4,1024], index: 2, kind: input, shape index: {}]
  %s3 = inlined_call_operand.vmem [shape: f32[4,1024], index: 3, kind: input, shape index: {}]
  %s4 = inlined_call_operand.vmem [shape: f32[1,1024], index: 4, kind: output, shape index: {0}]
  %s5 = inlined_call_operand.vmem [shape: f32[1,1024], index: 5, kind: output, shape index: {1}]
  %6 = xla_tuple %s4, %s5
  %s7 = sld [smem:[#allocation0]]
  $region80: #{multibox_loss.6} parent=0
    _
  %s9 = ssub.s32 1, %s7
  %s10 = scalar_select 0, %s9, %s7
  $region1: #{multibox_loss.6} parent=0
    #allocation2 [shape = 'u8[98304]{0}', space=vmem, size = 0x18000, scoped, tag = 'input window, operand 0']
    loop: start=0, step=1, limit=4
    $region2: #{multibox_loss.6} parent=1 // loop_pre_header
      _
    $region3: #{multibox_loss.6} parent=1 // loop_header
      %s12 = sphi 0, %s16
      %p13 = scmp.ge.s32.totalorder %s12, 4
      %s22 = sphi 0, %s24
      %s25 = sphi 0, %s22
      %s26 = sphi 0, %s25
      %s42 = sphi 0, %s26
      %s48 = sphi 0, %s50
      %s51 = sphi 0, %s48
      %s52 = sphi 0, %s51
      %s68 = sphi 0, %s52
      %s74 = sphi 0, %s76
      %s77 = sphi 0, %s74
      %s78 = sphi 0, %s77
      %s94 = sphi 0, %s78
      %s100 = sphi 0, %s102
      %s103 = sphi 0, %s100
      %s104 = sphi 0, %s103
      %s120 = sphi 0, %s104
      %s126 = sphi 0, %s128
      %s129 = sphi 0, %s126
      %s130 = sphi 0, %s129
      %s146 = sphi 0, %s130
      %s152 = sphi 0, %s154
      %s155 = sphi 0, %s152
      %s156 = sphi 0, %s155
      %s172 = sphi 0, %s156
    $region4: #{multibox_loss.6} parent=1 // loop_header_branch
      %15 = sbr.rel (%p13) target = $region8
    $region5: #{multibox_loss.6} parent=1 // loop_body
      %s17 = ssub.s32 %s12, 1
      %s18 = ssub.s32 %s12, 2
      %s19 = sadd.s32 %s12, 1
      %s20 = ssub.s32 %s12, %s19
      %p21 = scmp.eq.s32.totalorder %s20, 0
      %s23 = sadd.s32 %s22, 1
      %s24 = scalar_select %p21, %s22, %s23
      %p27 = pneg %p21
      %p28 = scmp.eq.s32.totalorder %s12, 1
      %p29 = por %p27, %p28
      %p30 = scmp.ne.s32.totalorder %s22, %s25
      %p31 = scmp.eq.s32.totalorder %s12, 0
      %p32 = por %p30, %p31
      %p33 = scmp.ne.s32.totalorder %s22, %s25
      %p34 = scmp.eq.s32.totalorder %s17, 1
      %p35 = por %p33, %p34
      %p36 = scmp.ne.s32.totalorder %s25, %s26
      %p37 = scmp.eq.s32.totalorder %s17, 0
      %p38 = por %p36, %p37
      %p39 = scmp.ne.s32.totalorder %s25, %s26
      %p40 = scmp.eq.s32.totalorder %s18, 1
      %p41 = por %p39, %p40
      %p43 = scmp.ne.s32.totalorder %s26, %s42
      %p44 = scmp.eq.s32.totalorder %s18, 0
      %p45 = por %p43, %p44
      %s46 = ssub.s32 %s12, %s19
      %p47 = scmp.eq.s32.totalorder %s46, 0
      %s49 = sadd.s32 %s48, 1
      %s50 = scalar_select %p47, %s48, %s49
      %p53 = pneg %p47
      %p54 = scmp.eq.s32.totalorder %s12, 1
      %p55 = por %p53, %p54
      %p56 = scmp.ne.s32.totalorder %s48, %s51
      %p57 = scmp.eq.s32.totalorder %s12, 0
      %p58 = por %p56, %p57
      %p59 = scmp.ne.s32.totalorder %s48, %s51
      %p60 = scmp.eq.s32.totalorder %s17, 1
      %p61 = por %p59, %p60
      %p62 = scmp.ne.s32.totalorder %s51, %s52
      %p63 = scmp.eq.s32.totalorder %s17, 0
      %p64 = por %p62, %p63
      %p65 = scmp.ne.s32.totalorder %s51, %s52
      %p66 = scmp.eq.s32.totalorder %s18, 1
      %p67 = por %p65, %p66
      %p69 = scmp.ne.s32.totalorder %s52, %s68
      %p70 = scmp.eq.s32.totalorder %s18, 0
      %p71 = por %p69, %p70
      %s72 = ssub.s32 %s12, %s19
      %p73 = scmp.eq.s32.totalorder %s72, 0
      %s75 = sadd.s32 %s74, 1
      %s76 = scalar_select %p73, %s74, %s75
      %p79 = pneg %p73
      %p80 = scmp.eq.s32.totalorder %s12, 1
      %p81 = por %p79, %p80
      %p82 = scmp.ne.s32.totalorder %s74, %s77
      %p83 = scmp.eq.s32.totalorder %s12, 0
      %p84 = por %p82, %p83
      %p85 = scmp.ne.s32.totalorder %s74, %s77
      %p86 = scmp.eq.s32.totalorder %s17, 1
      %p87 = por %p85, %p86
      %p88 = scmp.ne.s32.totalorder %s77, %s78
      %p89 = scmp.eq.s32.totalorder %s17, 0
      %p90 = por %p88, %p89
      %p91 = scmp.ne.s32.totalorder %s77, %s78
      %p92 = scmp.eq.s32.totalorder %s18, 1
      %p93 = por %p91, %p92
      %p95 = scmp.ne.s32.totalorder %s78, %s94
      %p96 = scmp.eq.s32.totalorder %s18, 0
      %p97 = por %p95, %p96
      %s98 = ssub.s32 %s12, %s19
      %p99 = scmp.eq.s32.totalorder %s98, 0
      %s101 = sadd.s32 %s100, 1
      %s102 = scalar_select %p99, %s100, %s101
      %p105 = pneg %p99
      %p106 = scmp.eq.s32.totalorder %s12, 1
      %p107 = por %p105, %p106
      %p108 = scmp.ne.s32.totalorder %s100, %s103
      %p109 = scmp.eq.s32.totalorder %s12, 0
      %p110 = por %p108, %p109
      %p111 = scmp.ne.s32.totalorder %s100, %s103
      %p112 = scmp.eq.s32.totalorder %s17, 1
      %p113 = por %p111, %p112
      %p114 = scmp.ne.s32.totalorder %s103, %s104
      %p115 = scmp.eq.s32.totalorder %s17, 0
      %p116 = por %p114, %p115
      %p117 = scmp.ne.s32.totalorder %s103, %s104
      %p118 = scmp.eq.s32.totalorder %s18, 1
      %p119 = por %p117, %p118
      %p121 = scmp.ne.s32.totalorder %s104, %s120
      %p122 = scmp.eq.s32.totalorder %s18, 0
      %p123 = por %p121, %p122
      %s124 = ssub.s32 %s12, %s19
      %p125 = scmp.eq.s32.totalorder %s124, 0
      %s127 = sadd.s32 %s126, 1
      %s128 = scalar_select %p125, %s126, %s127
      %p131 = pneg %p125
      %p132 = scmp.eq.s32.totalorder %s12, 1
      %p133 = por %p131, %p132
      %p134 = scmp.ne.s32.totalorder %s126, %s129
      %p135 = scmp.eq.s32.totalorder %s12, 0
      %p136 = por %p134, %p135
      %p137 = scmp.ne.s32.totalorder %s126, %s129
      %p138 = scmp.eq.s32.totalorder %s17, 1
      %p139 = por %p137, %p138
      %p140 = scmp.ne.s32.totalorder %s129, %s130
      %p141 = scmp.eq.s32.totalorder %s17, 0
      %p142 = por %p140, %p141
      %p143 = scmp.ne.s32.totalorder %s129, %s130
      %p144 = scmp.eq.s32.totalorder %s18, 1
      %p145 = por %p143, %p144
      %p147 = scmp.ne.s32.totalorder %s130, %s146
      %p148 = scmp.eq.s32.totalorder %s18, 0
      %p149 = por %p147, %p148
      %s150 = ssub.s32 %s12, %s19
      %p151 = scmp.eq.s32.totalorder %s150, 0
      %s153 = sadd.s32 %s152, 1
      %s154 = scalar_select %p151, %s152, %s153
      %p157 = pneg %p151
      %p158 = scmp.eq.s32.totalorder %s12, 1
      %p159 = por %p157, %p158
      %p160 = scmp.ne.s32.totalorder %s152, %s155
      %p161 = scmp.eq.s32.totalorder %s12, 0
      %p162 = por %p160, %p161
      %p163 = scmp.ne.s32.totalorder %s152, %s155
      %p164 = scmp.eq.s32.totalorder %s17, 1
      %p165 = por %p163, %p164
      %p166 = scmp.ne.s32.totalorder %s155, %s156
      %p167 = scmp.eq.s32.totalorder %s17, 0
      %p168 = por %p166, %p167
      %p169 = scmp.ne.s32.totalorder %s155, %s156
      %p170 = scmp.eq.s32.totalorder %s18, 1
      %p171 = por %p169, %p170
      %p173 = scmp.ne.s32.totalorder %s156, %s172
      %p174 = scmp.eq.s32.totalorder %s18, 0
      %p175 = por %p173, %p174
      %p176 = scmp.le.s32.totalorder 1, %s12
      %p177 = scmp.lt.s32.totalorder %s12, 3
      %p178 = pnand %p176, %p177
      %p179 = pneg %p178
      // Predicated region
      $region9: #{multibox_loss.6} parent=5 // pred_check
        _
      $region10: #{multibox_loss.6} parent=5 // pred_check_branch
        %181 = sbr.rel (%p178) target = $region12
      $region11: #{multibox_loss.6} parent=5 // pred_region
        %s182 = ssub.s32 %s12, 1
      $region12: #{multibox_loss.6} parent=5 // pred_fallthru
        _
      %p183 = scmp.lt.s32.totalorder %s12, 2
      // Predicated region
      $region13: #{multibox_loss.6} parent=5 // pred_check
        %p184 = pneg %p183
      $region14: #{multibox_loss.6} parent=5 // pred_check_branch
        %186 = sbr.rel (%p184) target = $region16
      $region15: #{multibox_loss.6} parent=5 // pred_region
        // Predicated region
        $region17: #{multibox_loss.6} parent=15 // pred_check
          %p187 = pneg %p32
        $region18: #{multibox_loss.6} parent=15 // pred_check_branch
          %189 = sbr.rel (%p187) target = $region20
        $region19: #{multibox_loss.6} parent=15 // pred_region
          %s190 = sand.u32 %s22, 1
          %s191 = sand.u32 %s22, 1
          %s192 = smul.addr %s191, 96
          %s193 = scalar_lea.vmem [#allocation2], %s192
          %s194 = smul.u32 4, %s12
          %s195 = smul.addr %s194, 8
          %s196 = scalar_lea.vmem %s0, %s195
          // Predicated region
          $region21: #{multibox_loss.6} parent=19 // pred_check
            _
          $region22: #{multibox_loss.6} parent=19 // pred_check_branch
            %198 = sbr.rel (0) target = $region24
          $region23: #{multibox_loss.6} parent=19 // pred_region
            // Predicated region
            $region25: #{multibox_loss.6} parent=23 // pred_check
              _
            $region26: #{multibox_loss.6} parent=23 // pred_check_branch
              %200 = sbr.rel (0) target = $region28
            $region27: #{multibox_loss.6} parent=23 // pred_region
              loop: start=0, step=1, limit=1
              $region29: #{multibox_loss.6} parent=27 // loop_pre_header
                _
              $region30: #{multibox_loss.6} parent=27 // loop_header
                %s202 = sphi 0, %s206
                %p203 = scmp.ge.s32.totalorder %s202, 1
                %s207 = sphi %s196, %s196
                %s208 = sphi %s193, %s193
              $region31: #{multibox_loss.6} parent=27 // loop_header_branch
                %205 = sbr.rel (%p203) target = $region35
              $region32: #{multibox_loss.6} parent=27 // loop_body
                %v209 = vld [vmem:[%s207] sm:$0xff]
                %210 = vst [vmem:[%s208] sm:$0xff] %v209
                %v211 = vld [vmem:[%s207 + $0x8] sm:$0xff]
                %212 = vst [vmem:[%s208 + $0x8] sm:$0xff] %v211
                %v213 = vld [vmem:[%s207 + $0x10] sm:$0xff]
                %214 = vst [vmem:[%s208 + $0x10] sm:$0xff] %v213
                %v215 = vld [vmem:[%s207 + $0x18] sm:$0xff]
                %216 = vst [vmem:[%s208 + $0x18] sm:$0xff] %v215
                %v217 = vld [vmem:[%s207 + $0x40] sm:$0xff]
                %218 = vst [vmem:[%s208 + $0x20] sm:$0xff] %v217
                %v219 = vld [vmem:[%s207 + $0x48] sm:$0xff]
                %220 = vst [vmem:[%s208 + $0x28] sm:$0xff] %v219
                %v221 = vld [vmem:[%s207 + $0x50] sm:$0xff]
                %222 = vst [vmem:[%s208 + $0x30] sm:$0xff] %v221
                %v223 = vld [vmem:[%s207 + $0x58] sm:$0xff]
                %224 = vst [vmem:[%s208 + $0x38] sm:$0xff] %v223
                %v225 = vld [vmem:[%s207 + $0x80] sm:$0xff]
                %226 = vst [vmem:[%s208 + $0x40] sm:$0xff] %v225
                %v227 = vld [vmem:[%s207 + $0x88] sm:$0xff]
                %228 = vst [vmem:[%s208 + $0x48] sm:$0xff] %v227
                %v229 = vld [vmem:[%s207 + $0x90] sm:$0xff]
                %230 = vst [vmem:[%s208 + $0x50] sm:$0xff] %v229
                %v231 = vld [vmem:[%s207 + $0x98] sm:$0xff]
                %232 = vst [vmem:[%s208 + $0x58] sm:$0xff] %v231
              $region33: #{multibox_loss.6} parent=27 // loop_footer
                %s206 = sadd.s32 1, %s202
              $region34: #{multibox_loss.6} parent=27 // loop_footer_branch
                %201 = sbr.rel target = $region30
              $region35: #{multibox_loss.6} parent=27 // loop_exit
                _
            $region28: #{multibox_loss.6} parent=23 // pred_fallthru
              _
            // Predicated region
            $region36: #{multibox_loss.6} parent=23 // pred_check
              _
            $region37: #{multibox_loss.6} parent=23 // pred_check_branch
              %234 = sbr.rel target = $region39
            $region38: #{multibox_loss.6} parent=23 // pred_region
              _
            $region39: #{multibox_loss.6} parent=23 // pred_fallthru
              _
          $region24: #{multibox_loss.6} parent=19 // pred_fallthru
            _
          %235 = vnop
        $region20: #{multibox_loss.6} parent=15 // pred_fallthru
          _
        // Predicated region
        $region40: #{multibox_loss.6} parent=15 // pred_check
          %p236 = pneg %p58
        $region41: #{multibox_loss.6} parent=15 // pred_check_branch
          %238 = sbr.rel (%p236) target = $region43
        $region42: #{multibox_loss.6} parent=15 // pred_region
          %s239 = smul.u32 4, %s12
          %p240 = scmp.lt.s32.totalorder %s239, 7
          %s241 = scalar_select %p240, %s239, 7
          %s242 = scalar_lea.vmem %s1, %s241
          %s243 = smul.u32 4, %s12
        $region43: #{multibox_loss.6} parent=15 // pred_fallthru
          _
        // Predicated region
        $region44: #{multibox_loss.6} parent=15 // pred_check
          %p244 = pneg %p84
        $region45: #{multibox_loss.6} parent=15 // pred_check_branch
          %246 = sbr.rel (%p244) target = $region47
        $region46: #{multibox_loss.6} parent=15 // pred_region
          %s247 = smul.u32 4, %s12
          %p248 = scmp.lt.s32.totalorder %s247, 7
          %s249 = scalar_select %p248, %s247, 7
          %s250 = smul.addr %s249, 4
          %s251 = scalar_lea.vmem %s2, %s250
          %s252 = smul.u32 4, %s12
        $region47: #{multibox_loss.6} parent=15 // pred_fallthru
          _
        // Predicated region
        $region48: #{multibox_loss.6} parent=15 // pred_check
          %p253 = pneg %p110
        $region49: #{multibox_loss.6} parent=15 // pred_check_branch
          %255 = sbr.rel (%p253) target = $region51
        $region50: #{multibox_loss.6} parent=15 // pred_region
          %s256 = smul.u32 4, %s12
          %p257 = scmp.lt.s32.totalorder %s256, 7
          %s258 = scalar_select %p257, %s256, 7
          %s259 = smul.addr %s258, 4
          %s260 = scalar_lea.vmem %s3, %s259
          %s261 = smul.u32 4, %s12
        $region51: #{multibox_loss.6} parent=15 // pred_fallthru
          _
      $region16: #{multibox_loss.6} parent=5 // pred_fallthru
        _
      %p262 = scmp.le.s32.totalorder 1, %s12
      %p263 = scmp.lt.s32.totalorder %s12, 3
      %p264 = pnand %p262, %p263
      %p265 = pneg %p264
      // Predicated region
      $region52: #{multibox_loss.6} parent=5 // pred_check
        _
      $region53: #{multibox_loss.6} parent=5 // pred_check_branch
        %267 = sbr.rel (%p264) target = $region55
      $region54: #{multibox_loss.6} parent=5 // pred_region
        %s268 = ssub.s32 %s12, 1
        %s269 = sand.u32 %s25, 1
        %s270 = sand.u32 %s25, 1
        %s271 = smul.addr %s270, 96
        %s272 = scalar_lea.vmem [#allocation2], %s271
        // Predicated region
        $region56: #{multibox_loss.6} parent=54 // pred_check
          %p273 = pneg %p38
        $region57: #{multibox_loss.6} parent=54 // pred_check_branch
          %275 = sbr.rel (%p273) target = $region59
        $region58: #{multibox_loss.6} parent=54 // pred_region
          _
        $region59: #{multibox_loss.6} parent=54 // pred_fallthru
          _
        %s276 = sand.u32 %s25, 1
        %s277 = sand.u32 %s25, 1
        %s278 = smul.addr %s277, 96
        %s279 = scalar_lea.vmem [#allocation2], %s278
        %p280 = pneg %p38
        %p281 = pneg %p35
        %s282 = smul.u32 4, %s17
        %p283 = scmp.lt.s32.totalorder %s282, 7
        %s284 = scalar_select %p283, %s282, 7
        %s285 = scalar_lea.vmem %s1, %s284
        %p286 = pneg %p64
        %p287 = pneg %p61
        %s288 = smul.u32 4, %s17
        %p289 = scmp.lt.s32.totalorder %s288, 7
        %s290 = scalar_select %p289, %s288, 7
        %s291 = smul.addr %s290, 4
        %s292 = scalar_lea.vmem %s2, %s291
        %p293 = pneg %p90
        %p294 = pneg %p87
        %s295 = smul.u32 4, %s17
        %p296 = scmp.lt.s32.totalorder %s295, 7
        %s297 = scalar_select %p296, %s295, 7
        %s298 = smul.addr %s297, 4
        %s299 = scalar_lea.vmem %s3, %s298
        %p300 = pneg %p116
        %p301 = pneg %p113
        %p302 = pneg %p142
        %p303 = pneg %p139
        %s304 = smul.u32 4, %s17
        %p305 = scmp.lt.s32.totalorder %s304, 7
        %s306 = scalar_select %p305, %s304, 7
        %s307 = scalar_lea.vmem %s4, %s306
        %p308 = pneg %p168
        %p309 = pneg %p165
        %s310 = smul.u32 4, %s17
        %p311 = scmp.lt.s32.totalorder %s310, 7
        %s312 = scalar_select %p311, %s310, 7
        %s313 = scalar_lea.vmem %s5, %s312
        %s314 = smul.u32 4, %s17
        %s315 = smul.u32 4, %s17
        %p316 = scmp.lt.s32.totalorder %s315, 7
        %s317 = scalar_select %p316, %s315, 7
        %s318 = scalar_lea.vmem %s1, %s317
        %s319 = smul.u32 4, %s17
        %s320 = smul.u32 4, %s17
        %p321 = scmp.lt.s32.totalorder %s320, 7
        %s322 = scalar_select %p321, %s320, 7
        %s323 = smul.addr %s322, 4
        %s324 = scalar_lea.vmem %s2, %s323
        %s325 = smul.u32 4, %s17
        %s326 = smul.u32 4, %s17
        %p327 = scmp.lt.s32.totalorder %s326, 7
        %s328 = scalar_select %p327, %s326, 7
        %s329 = smul.addr %s328, 4
        %s330 = scalar_lea.vmem %s3, %s329
        %s331 = smul.u32 4, %s17
        %s332 = smul.u32 4, %s17
        %p333 = scmp.lt.s32.totalorder %s332, 7
        %s334 = scalar_select %p333, %s332, 7
        %s335 = scalar_lea.vmem %s4, %s334
        %s336 = smul.u32 4, %s17
        %s337 = smul.u32 4, %s17
        %p338 = scmp.lt.s32.totalorder %s337, 7
        %s339 = scalar_select %p338, %s337, 7
        %s340 = scalar_lea.vmem %s5, %s339
        %s341 = smul.u32 4, %s17
        %v342 = vld [vmem:[%s272] sm:$0xff]
        %v343 = vld [vmem:[%s272 + $0x8] sm:$0xff]
        %v344 = vld [vmem:[%s272 + $0x10] sm:$0xff]
        %v345 = vld [vmem:[%s272 + $0x18] sm:$0xff]
        %v346 = vld [vmem:[%s272 + $0x20] sm:$0xff]
        %v347 = vld [vmem:[%s272 + $0x28] sm:$0xff]
        %v348 = vld [vmem:[%s272 + $0x30] sm:$0xff]
        %v349 = vld [vmem:[%s272 + $0x38] sm:$0xff]
        %v350 = vld [vmem:[%s272 + $0x40] sm:$0x1f]
        %v351 = vld [vmem:[%s272 + $0x48] sm:$0x1f]
        %v352 = vld [vmem:[%s272 + $0x50] sm:$0x1f]
        %v353 = vld [vmem:[%s272 + $0x58] sm:$0x1f]
        %v354 = vld [vmem:[%s318] sm:$0xf]
        %v355 = vmax.f32 %v342, %v346
        %vm356 = vcmask 1044480
        %v357 = vsel %vm356, %v350, -inf
        %v358 = vmax.f32 %v355, %v357
        %v359 = vrot.slane %v358, 4
        %v360 = vmax.f32 %v358, %v359
        %v361 = vrot.slane %v360, 2
        %v362 = vmax.f32 %v360, %v361
        %v363 = vrot.slane %v362, 1
        %v364 = vmax.f32 %v362, %v363
        %v365 = vmax.f32 %v343, %v347
        %v366 = vsel %vm356, %v351, -inf
        %v367 = vmax.f32 %v365, %v366
        %v368 = vrot.slane %v367, 4
        %v369 = vmax.f32 %v367, %v368
        %v370 = vrot.slane %v369, 2
        %v371 = vmax.f32 %v369, %v370
        %v372 = vrot.slane %v371, 1
        %v373 = vmax.f32 %v371, %v372
        %v374 = vmax.f32 %v344, %v348
        %v375 = vsel %vm356, %v352, -inf
        %v376 = vmax.f32 %v374, %v375
        %v377 = vrot.slane %v376, 4
        %v378 = vmax.f32 %v376, %v377
        %v379 = vrot.slane %v378, 2
        %v380 = vmax.f32 %v378, %v379
        %v381 = vrot.slane %v380, 1
        %v382 = vmax.f32 %v380, %v381
        %v383 = vmax.f32 %v345, %v349
        %v384 = vsel %vm356, %v353, -inf
        %v385 = vmax.f32 %v383, %v384
        %v386 = vrot.slane %v385, 4
        %v387 = vmax.f32 %v385, %v386
        %v388 = vrot.slane %v387, 2
        %v389 = vmax.f32 %v387, %v388
        %v390 = vrot.slane %v389, 1
        %v391 = vmax.f32 %v389, %v390
        %v392 = vsub.f32 %v342, %v364
        %v393 = vsub.f32 %v343, %v373
        %v394 = vsub.f32 %v344, %v382
        %v395 = vsub.f32 %v345, %v391
        %v396 = vsub.f32 %v346, %v364
        %v397 = vsub.f32 %v347, %v373
        %v398 = vsub.f32 %v348, %v382
        %v399 = vsub.f32 %v349, %v391
        %v400 = vsub.f32 %v350, %v364
        %v401 = vsub.f32 %v351, %v373
        %v402 = vsub.f32 %v352, %v382
        %v403 = vsub.f32 %v353, %v391
        %v404 = vmul.f32 %v392, 1.442695
        %v405 = vpow.pop %v404
        %v406 = vmul.f32 %v393, 1.442695
        %v407 = vpow.pop %v406
        %v408 = vmul.f32 %v394, 1.442695
        %v409 = vpow.pop %v408
        %v410 = vmul.f32 %v395, 1.442695
        %v411 = vpow.pop %v410
        %v412 = vmul.f32 %v396, 1.442695
        %v413 = vpow.pop %v412
        %v414 = vmul.f32 %v397, 1.442695
        %v415 = vpow.pop %v414
        %v416 = vmul.f32 %v398, 1.442695
        %v417 = vpow.pop %v416
        %v418 = vmul.f32 %v399, 1.442695
        %v419 = vpow.pop %v418
        %v420 = vmul.f32 %v400, 1.442695
        %v421 = vpow.pop %v420
        %v422 = vmul.f32 %v401, 1.442695
        %v423 = vpow.pop %v422
        %v424 = vmul.f32 %v402, 1.442695
        %v425 = vpow.pop %v424
        %v426 = vmul.f32 %v403, 1.442695
        %v427 = vpow.pop %v426
        %v428 = vadd.f32 %v405, %v413
        %v429 = vsel %vm356, %v421, 0.0
        %v430 = vadd.f32 %v428, %v429
        %v431 = vrot.slane %v430, 4
        %v432 = vadd.f32 %v430, %v431
        %v433 = vrot.slane %v432, 2
        %v434 = vadd.f32 %v432, %v433
        %v435 = vrot.slane %v434, 1
        %v436 = vadd.f32 %v434, %v435
        %v437 = vadd.f32 %v407, %v415
        %v438 = vsel %vm356, %v423, 0.0
        %v439 = vadd.f32 %v437, %v438
        %v440 = vrot.slane %v439, 4
        %v441 = vadd.f32 %v439, %v440
        %v442 = vrot.slane %v441, 2
        %v443 = vadd.f32 %v441, %v442
        %v444 = vrot.slane %v443, 1
        %v445 = vadd.f32 %v443, %v444
        %v446 = vadd.f32 %v409, %v417
        %v447 = vsel %vm356, %v425, 0.0
        %v448 = vadd.f32 %v446, %v447
        %v449 = vrot.slane %v448, 4
        %v450 = vadd.f32 %v448, %v449
        %v451 = vrot.slane %v450, 2
        %v452 = vadd.f32 %v450, %v451
        %v453 = vrot.slane %v452, 1
        %v454 = vadd.f32 %v452, %v453
        %v455 = vadd.f32 %v411, %v419
        %v456 = vsel %vm356, %v427, 0.0
        %v457 = vadd.f32 %v455, %v456
        %v458 = vrot.slane %v457, 4
        %v459 = vadd.f32 %v457, %v458
        %v460 = vrot.slane %v459, 2
        %v461 = vadd.f32 %v459, %v460
        %v462 = vrot.slane %v461, 1
        %v463 = vadd.f32 %v461, %v462
        %v464 = vlog2.pop %v436
        %v465 = vmul.f32 %v464, 0.6931472
        %v466 = vlog2.pop %v445
        %v467 = vmul.f32 %v466, 0.6931472
        %v468 = vlog2.pop %v454
        %v469 = vmul.f32 %v468, 0.6931472
        %v470 = vlog2.pop %v463
        %v471 = vmul.f32 %v470, 0.6931472
        %v472 = vadd.f32 %v364, %v465
        %v473 = vadd.f32 %v373, %v467
        %v474 = vadd.f32 %v382, %v469
        %v475 = vadd.f32 %v391, %v471
        %v476 = vlaneseq
        %v477 = vshrl.u32 %v476, 7
        %v478 = vadd.s32 %v477, 8
        %v479 = vadd.s32 %v477, 16
        %v480 = vlaneseq
        %v481 = vshrl.u32 %v480, 7
        %v482 = vsub.s32 0, %v481
        %v483 = vrot.slane %v354, %v482
        %v484 = vlaneseq
        %v485 = vshrl.u32 %v484, 7
        %v486 = vsub.s32 1, %v485
        %v487 = vrot.slane %v354, %v486
        %v488 = vlaneseq
        %v489 = vshrl.u32 %v488, 7
        %v490 = vsub.s32 2, %v489
        %v491 = vrot.slane %v354, %v490
        %v492 = vlaneseq
        %v493 = vshrl.u32 %v492, 7
        %v494 = vsub.s32 3, %v493
        %v495 = vrot.slane %v354, %v494
        %vm496 = vcmp.eq.s32.totalorder %v477, %v483
        %vm497 = vcmp.eq.s32.totalorder %v477, %v487
        %vm498 = vcmp.eq.s32.totalorder %v477, %v491
        %vm499 = vcmp.eq.s32.totalorder %v477, %v495
        %vm500 = vcmp.eq.s32.totalorder %v478, %v483
        %vm501 = vcmp.eq.s32.totalorder %v478, %v487
        %vm502 = vcmp.eq.s32.totalorder %v478, %v491
        %vm503 = vcmp.eq.s32.totalorder %v478, %v495
        %vm504 = vcmp.eq.s32.totalorder %v479, %v483
        %vm505 = vcmp.eq.s32.totalorder %v479, %v487
        %vm506 = vcmp.eq.s32.totalorder %v479, %v491
        %vm507 = vcmp.eq.s32.totalorder %v479, %v495
        %v508 = vsel %vm496, 1, 0
        %v509 = vsel %vm497, 1, 0
        %v510 = vsel %vm498, 1, 0
        %v511 = vsel %vm499, 1, 0
        %v512 = vsel %vm500, 1, 0
        %v513 = vsel %vm501, 1, 0
        %v514 = vsel %vm502, 1, 0
        %v515 = vsel %vm503, 1, 0
        %v516 = vsel %vm504, 1, 0
        %v517 = vsel %vm505, 1, 0
        %v518 = vsel %vm506, 1, 0
        %v519 = vsel %vm507, 1, 0
        %v520 = vcvt.s32.f32 %v508
        %v521 = vcvt.s32.f32 %v509
        %v522 = vcvt.s32.f32 %v510
        %v523 = vcvt.s32.f32 %v511
        %v524 = vcvt.s32.f32 %v512
        %v525 = vcvt.s32.f32 %v513
        %v526 = vcvt.s32.f32 %v514
        %v527 = vcvt.s32.f32 %v515
        %v528 = vcvt.s32.f32 %v516
        %v529 = vcvt.s32.f32 %v517
        %v530 = vcvt.s32.f32 %v518
        %v531 = vcvt.s32.f32 %v519
        %v532 = vmul.f32 %v342, %v520
        %v533 = vmul.f32 %v343, %v521
        %v534 = vmul.f32 %v344, %v522
        %v535 = vmul.f32 %v345, %v523
        %v536 = vmul.f32 %v346, %v524
        %v537 = vmul.f32 %v347, %v525
        %v538 = vmul.f32 %v348, %v526
        %v539 = vmul.f32 %v349, %v527
        %v540 = vmul.f32 %v350, %v528
        %v541 = vmul.f32 %v351, %v529
        %v542 = vmul.f32 %v352, %v530
        %v543 = vmul.f32 %v353, %v531
        %v544 = vadd.f32 %v532, %v536
        %v545 = vsel %vm356, %v540, 0.0
        %v546 = vadd.f32 %v544, %v545
        %v547 = vrot.slane %v546, 4
        %v548 = vadd.f32 %v546, %v547
        %v549 = vrot.slane %v548, 2
        %v550 = vadd.f32 %v548, %v549
        %v551 = vrot.slane %v550, 1
        %v552 = vadd.f32 %v550, %v551
        %v553 = vadd.f32 %v533, %v537
        %v554 = vsel %vm356, %v541, 0.0
        %v555 = vadd.f32 %v553, %v554
        %v556 = vrot.slane %v555, 4
        %v557 = vadd.f32 %v555, %v556
        %v558 = vrot.slane %v557, 2
        %v559 = vadd.f32 %v557, %v558
        %v560 = vrot.slane %v559, 1
        %v561 = vadd.f32 %v559, %v560
        %v562 = vadd.f32 %v534, %v538
        %v563 = vsel %vm356, %v542, 0.0
        %v564 = vadd.f32 %v562, %v563
        %v565 = vrot.slane %v564, 4
        %v566 = vadd.f32 %v564, %v565
        %v567 = vrot.slane %v566, 2
        %v568 = vadd.f32 %v566, %v567
        %v569 = vrot.slane %v568, 1
        %v570 = vadd.f32 %v568, %v569
        %v571 = vadd.f32 %v535, %v539
        %v572 = vsel %vm356, %v543, 0.0
        %v573 = vadd.f32 %v571, %v572
        %v574 = vrot.slane %v573, 4
        %v575 = vadd.f32 %v573, %v574
        %v576 = vrot.slane %v575, 2
        %v577 = vadd.f32 %v575, %v576
        %v578 = vrot.slane %v577, 1
        %v579 = vadd.f32 %v577, %v578
        %v580 = vsub.f32 %v472, %v552
        %v581 = vsub.f32 %v473, %v561
        %v582 = vsub.f32 %v474, %v570
        %v583 = vsub.f32 %v475, %v579
        %v588 = vcombine.low %v580, %v581
        %v589 = vcombine.low %v582, %v583
        %v591 = vunpack.c.l.s4 1966171168
        %v592 = vunpack.c.0.s8 %v591
        %v593 = vlaneseq
        %v594 = vshrl.u32 %v593, 7
        %v595 = vsub.s32 %v592, %v594
        %v596 = vrot.slane %v588, %v595
        %v598 = vunpack.c.l.s4 1966171168
        %v599 = vunpack.c.0.s8 %v598
        %v600 = vlaneseq
        %v601 = vshrl.u32 %v600, 7
        %v602 = vsub.s32 %v599, %v601
        %v603 = vrot.slane %v589, %v602
        %v604 = vcombine.low %v596, %v603
        %v606 = vunpack.c.l.s4 1966171168
        %v607 = vunpack.c.0.s8 %v606
        %v608 = vlaneseq
        %v609 = vshrl.u32 %v608, 7
        %v610 = vsub.s32 %v607, %v609
        %v611 = vrot.slane %v604, %v610
        %v613 = vlaneseq
        %vm614 = vcmp.ge.s32.totalorder %v613, 0
        %vm615 = vcmp.lt.s32.totalorder %v613, 512
        %vm616 = vmand %vm614, %vm615
        %617 = vst.msk [vmem:[%s335] sm:$0xf] %vm616, %v611
        %v618 = vld [vmem:[%s324] sm:$0xff]
        %v619 = vld [vmem:[%s324 + $0x8] sm:$0xff]
        %v620 = vld [vmem:[%s330] sm:$0xff]
        %v621 = vld [vmem:[%s330 + $0x8] sm:$0xff]
        %v622 = vsub.f32 %v618, %v620
        %v623 = vsub.f32 %v619, %v621
        %v624 = vand.u32 2147483647, %v622
        %v625 = vand.u32 2147483647, %v623
        %vm626 = vcmp.lt.f32.partialorder %v624, 1.0
        %vm627 = vcmp.lt.f32.partialorder %v625, 1.0
        %v628 = vmul.f32 %v622, 0.5
        %v629 = vmul.f32 %v623, 0.5
        %v630 = vmul.f32 %v628, %v622
        %v631 = vmul.f32 %v629, %v623
        %v632 = vsub.f32 %v624, 0.5
        %v633 = vsub.f32 %v625, 0.5
        %v634 = vsel %vm626, %v630, %v632
        %v635 = vsel %vm627, %v631, %v633
        %v638 = vcombine.high %v634, %v634
        %v639 = vcombine.high %v635, %v635
        %vm642 = vcmask 1043456
        %v643 = vsel %vm642, %v634, 0.0
        %v644 = vrot.slane %v643, 4
        %v645 = vadd.f32 %v643, %v644
        %v646 = vrot.slane %v645, 2
        %v647 = vadd.f32 %v645, %v646
        %v648 = vrot.slane %v647, 1
        %v649 = vadd.f32 %v647, %v648
        %v650 = vsel %vm642, %v638, 0.0
        %v651 = vrot.slane %v650, 4
        %v652 = vadd.f32 %v650, %v651
        %v653 = vrot.slane %v652, 2
        %v654 = vadd.f32 %v652, %v653
        %v655 = vrot.slane %v654, 1
        %v656 = vadd.f32 %v654, %v655
        %v657 = vsel %vm642, %v635, 0.0
        %v658 = vrot.slane %v657, 4
        %v659 = vadd.f32 %v657, %v658
        %v660 = vrot.slane %v659, 2
        %v661 = vadd.f32 %v659, %v660
        %v662 = vrot.slane %v661, 1
        %v663 = vadd.f32 %v661, %v662
        %v664 = vsel %vm642, %v639, 0.0
        %v665 = vrot.slane %v664, 4
        %v666 = vadd.f32 %v664, %v665
        %v667 = vrot.slane %v666, 2
        %v668 = vadd.f32 %v666, %v667
        %v669 = vrot.slane %v668, 1
        %v670 = vadd.f32 %v668, %v669
        %v675 = vcombine.low %v649, %v656
        %v676 = vcombine.low %v663, %v670
        %v678 = vunpack.c.l.s4 1966171168
        %v679 = vunpack.c.0.s8 %v678
        %v680 = vlaneseq
        %v681 = vshrl.u32 %v680, 7
        %v682 = vsub.s32 %v679, %v681
        %v683 = vrot.slane %v675, %v682
        %v685 = vunpack.c.l.s4 1966171168
        %v686 = vunpack.c.0.s8 %v685
        %v687 = vlaneseq
        %v688 = vshrl.u32 %v687, 7
        %v689 = vsub.s32 %v686, %v688
        %v690 = vrot.slane %v676, %v689
        %v691 = vcombine.low %v683, %v690
        %v693 = vunpack.c.l.s4 1966171168
        %v694 = vunpack.c.0.s8 %v693
        %v695 = vlaneseq
        %v696 = vshrl.u32 %v695, 7
        %v697 = vsub.s32 %v694, %v696
        %v698 = vrot.slane %v691, %v697
        %700 = vst.msk [vmem:[%s340] sm:$0xf] %vm616, %v698
        %s701 = smul.u32 4, %s17
        %p702 = scmp.lt.s32.totalorder %s701, 7
        %s703 = scalar_select %p702, %s701, 7
        %s704 = scalar_lea.vmem %s4, %s703
        %s705 = smul.u32 4, %s17
        %p706 = scmp.lt.s32.totalorder %s705, 7
        %s707 = scalar_select %p706, %s705, 7
        %s708 = scalar_lea.vmem %s5, %s707
        // Predicated region
        $region60: #{multibox_loss.6} parent=54 // pred_check
          %p709 = pneg %p139
        $region61: #{multibox_loss.6} parent=54 // pred_check_branch
          %711 = sbr.rel (%p709) target = $region63
        $region62: #{multibox_loss.6} parent=54 // pred_region
          %s712 = smul.u32 4, %s17
        $region63: #{multibox_loss.6} parent=54 // pred_fallthru
          _
        // Predicated region
        $region64: #{multibox_loss.6} parent=54 // pred_check
          %p713 = pneg %p165
        $region65: #{multibox_loss.6} parent=54 // pred_check_branch
          %715 = sbr.rel (%p713) target = $region67
        $region66: #{multibox_loss.6} parent=54 // pred_region
          %s716 = smul.u32 4, %s17
        $region67: #{multibox_loss.6} parent=54 // pred_fallthru
          _
      $region55: #{multibox_loss.6} parent=5 // pred_fallthru
        _
      %p717 = scmp.le.s32.totalorder 2, %s12
      // Predicated region
      $region68: #{multibox_loss.6} parent=5 // pred_check
        %p718 = pneg %p717
      $region69: #{multibox_loss.6} parent=5 // pred_check_branch
        %720 = sbr.rel (%p718) target = $region71
      $region70: #{multibox_loss.6} parent=5 // pred_region
        %s721 = ssub.s32 %s12, 2
        // Predicated region
        $region72: #{multibox_loss.6} parent=70 // pred_check
          %p722 = pneg %p145
        $region73: #{multibox_loss.6} parent=70 // pred_check_branch
          %724 = sbr.rel (%p722) target = $region75
        $region74: #{multibox_loss.6} parent=70 // pred_region
          %s725 = smul.u32 4, %s18
          %p726 = scmp.lt.s32.totalorder %s725, 7
          %s727 = scalar_select %p726, %s725, 7
          %s728 = scalar_lea.vmem %s4, %s727
        $region75: #{multibox_loss.6} parent=70 // pred_fallthru
          _
        // Predicated region
        $region76: #{multibox_loss.6} parent=70 // pred_check
          %p729 = pneg %p171
        $region77: #{multibox_loss.6} parent=70 // pred_check_branch
          %731 = sbr.rel (%p729) target = $region79
        $region78: #{multibox_loss.6} parent=70 // pred_region
          %s732 = smul.u32 4, %s18
          %p733 = scmp.lt.s32.totalorder %s732, 7
          %s734 = scalar_select %p733, %s732, 7
          %s735 = scalar_lea.vmem %s5, %s734
        $region79: #{multibox_loss.6} parent=70 // pred_fallthru
          _
      $region71: #{multibox_loss.6} parent=5 // pred_fallthru
        _
    $region6: #{multibox_loss.6} parent=1 // loop_footer
      %s16 = sadd.s32 1, %s12
    $region7: #{multibox_loss.6} parent=1 // loop_footer_branch
      %11 = sbr.rel target = $region3
    $region8: #{multibox_loss.6} parent=1 // loop_exit
      _

// kernel: multibox_loss.4
$region0: #{multibox_loss.4}
  #allocation0 [shape = 'u32[]', space=smem, size = 0x4, offset = 0x4, fixed_abs, tag = 'smem constant byte address 0x4 - core index']
  #allocation1 [shape = 'u32[144,128]{1,0:T(1,128)}', space=vmem, size = 0x12000, scoped, tag = 'internal scratch']
  %s0 = inlined_call_operand.vmem [shape: f32[4,4], index: 0, kind: input, shape index: {}]
  %s1 = inlined_call_operand.vmem [shape: s32[4], index: 1, kind: input, shape index: {}]
  %s2 = inlined_call_operand.vmem [shape: f32[4,512], index: 2, kind: input, shape index: {}]
  %s3 = inlined_call_operand.vmem [shape: f32[4,512], index: 3, kind: input, shape index: {}]
  %s4 = inlined_call_operand.vmem [shape: f32[4,512], index: 4, kind: output, shape index: {0}]
  %s5 = inlined_call_operand.vmem [shape: s32[1,512], index: 5, kind: output, shape index: {1}]
  %6 = xla_tuple %s4, %s5
  %s7 = sld [smem:[#allocation0]]
  $region42: #{multibox_loss.4} parent=0
    _
  %s9 = ssub.s32 1, %s7
  %s10 = scalar_select 0, %s9, %s7
  $region1: #{multibox_loss.4} parent=0
    #allocation2 [shape = 'u8[2048]{0}', space=smem, size = 0x800, scoped, tag = 'input window, operand 0, single buffered']
    #allocation3 [shape = 's32[1]{0}', space=sflag, size = 0x4, scoped, tag = 'scoped memory for multibox_loss.4']
    #allocation4 [shape = 'u8[512]{0}', space=smem, size = 0x200, scoped, tag = 'input window, operand 1, single buffered']
    #allocation5 [shape = 's32[1]{0}', space=sflag, size = 0x4, scoped, tag = 'scoped memory for multibox_loss.4']
    %11 = vsyncpa [#allocation3], 0
    %12 = vsyncpa [#allocation5], 0
    // Predicated region
    $region2: #{multibox_loss.4} parent=1 // pred_check
      _
    $region3: #{multibox_loss.4} parent=1 // pred_check_branch
      %14 = sbr.rel (0) target = $region5
    $region4: #{multibox_loss.4} parent=1 // pred_region
      %s16 = ssub.s32 64, 64
      %17 = vsyncadd [#allocation3], %s16
      %s19 = sshll.u32 %s0, 4
      %s20 = int_to_ptr.vmem [resolvable:$true] %s19
      %22 = dma.vmem_to_smem %s20, 64, [#allocation2], [#allocation3]
    $region5: #{multibox_loss.4} parent=1 // pred_fallthru
      _
    // Predicated region
    $region6: #{multibox_loss.4} parent=1 // pred_check
      _
    $region7: #{multibox_loss.4} parent=1 // pred_check_branch
      %24 = sbr.rel (0) target = $region9
    $region8: #{multibox_loss.4} parent=1 // pred_region
      %s26 = ssub.s32 16, 16
      %27 = vsyncadd [#allocation5], %s26
      %s29 = sshll.u32 %s1, 4
      %s30 = int_to_ptr.vmem [resolvable:$true] %s29
      %32 = dma.vmem_to_smem %s30, 16, [#allocation4], [#allocation5]
    $region9: #{multibox_loss.4} parent=1 // pred_fallthru
      _
    // Predicated region
    $region10: #{multibox_loss.4} parent=1 // pred_check
      _
    $region11: #{multibox_loss.4} parent=1 // pred_check_branch
      %34 = sbr.rel (0) target = $region13
    $region12: #{multibox_loss.4} parent=1 // pred_region
      _
    $region13: #{multibox_loss.4} parent=1 // pred_fallthru
      _
    // Predicated region
    $region14: #{multibox_loss.4} parent=1 // pred_check
      _
    $region15: #{multibox_loss.4} parent=1 // pred_check_branch
      %36 = sbr.rel (0) target = $region17
    $region16: #{multibox_loss.4} parent=1 // pred_region
      _
    $region17: #{multibox_loss.4} parent=1 // pred_fallthru
      _
    // Predicated region
    $region18: #{multibox_loss.4} parent=1 // pred_check
      _
    $region19: #{multibox_loss.4} parent=1 // pred_check_branch
      %38 = sbr.rel (0) target = $region21
    $region20: #{multibox_loss.4} parent=1 // pred_region
      %39 = dma.done [#allocation3], 64
    $region21: #{multibox_loss.4} parent=1 // pred_fallthru
      _
    // Predicated region
    $region22: #{multibox_loss.4} parent=1 // pred_check
      _
    $region23: #{multibox_loss.4} parent=1 // pred_check_branch
      %41 = sbr.rel (0) target = $region25
    $region24: #{multibox_loss.4} parent=1 // pred_region
      %42 = dma.done [#allocation5], 16
    $region25: #{multibox_loss.4} parent=1 // pred_fallthru
      _
    %43 = sfence
    %v44 = vld [vmem:[%s2] ss:$4 sm:$0xf]
    %s45 = scalar_lea.vmem %s2, 1
    %v46 = vld [vmem:[%s45] ss:$4 sm:$0xf]
    %s47 = scalar_lea.vmem %s2, 2
    %v48 = vld [vmem:[%s47] ss:$4 sm:$0xf]
    %s49 = scalar_lea.vmem %s2, 3
    %v50 = vld [vmem:[%s49] ss:$4 sm:$0xf]
    %v51 = vsub.f32 %v48, %v44
    %v52 = vsub.f32 %v50, %v46
    %v53 = vmul.f32 %v51, %v52
    %v54 = vlaneseq
    %v55 = vand.u32 %v54, 127
    %v56 = vadd.s32 %v55, 128
    %v57 = vadd.s32 %v55, 256
    %v58 = vadd.s32 %v55, 384
    %s59 = sld [smem:[#allocation2]]
    %s60 = sld [smem:[#allocation2 + $0x1]]
    %s61 = sld [smem:[#allocation2 + $0x2]]
    %s62 = sld [smem:[#allocation2 + $0x3]]
    %s63 = ssub.f32 %s61, %s59
    %s64 = ssub.f32 %s62, %s60
    %s65 = smul.f32 %s63, %s64
    %v66 = vstv %s59
    %v67 = vmax.f32 %v44, %v66
    %v68 = vstv %s60
    %v69 = vmax.f32 %v46, %v68
    %v70 = vstv %s61
    %v71 = vmin.f32 %v48, %v70
    %v72 = vstv %s62
    %v73 = vmin.f32 %v50, %v72
    %v74 = vsub.f32 %v71, %v67
    %v75 = vmax.f32 %v74, 0.0
    %v76 = vsub.f32 %v73, %v69
    %v77 = vmax.f32 %v76, 0.0
    %v78 = vmul.f32 %v75, %v77
    %v79 = vstv %s65
    %v80 = vadd.f32 %v53, %v79
    %v81 = vsub.f32 %v80, %v78
    %v82 = vrcp.pop %v81
    %v83 = vmul.f32 %v78, %v82
    %vm84 = vcmp.gt.f32.partialorder %v83, -1.0
    %v85 = vsel %vm84, %v83, -1.0
    %v87 = vlaneseq
    %v88 = vshrl.u32 %v87, 7
    %v89 = vsub.s32 0, %v88
    %v90 = vrot.slane %v83, %v89
    %v91 = vlaneseq
    %v92 = vshrl.u32 %v91, 7
    %v93 = vsub.s32 1, %v92
    %v94 = vrot.slane %v83, %v93
    %v95 = vlaneseq
    %v96 = vshrl.u32 %v95, 7
    %v97 = vsub.s32 2, %v96
    %v98 = vrot.slane %v83, %v97
    %v99 = vlaneseq
    %v100 = vshrl.u32 %v99, 7
    %v101 = vsub.s32 3, %v100
    %v102 = vrot.slane %v83, %v101
    %vm107 = vcmask 1040384
    %v108 = vsel %vm107, %v90, -inf
    %v109 = vsel %vm107, %v94, -inf
    %v110 = vsel %vm107, %v98, -inf
    %v111 = vsel %vm107, %v102, -inf
    %v112 = vmax.f32 %v108, %v109
    %v113 = vmax.f32 %v110, %v111
    %v114 = vmax.f32 %v112, %v113
    %115 = vmax.xlane.f32.xlu0 %v114
    %v116 = vpop.xlane.xlu0 %115
    %v118 = vlaneseq
    %v119 = vshrl.u32 %v118, 7
    %v120 = vsub.s32 0, %v119
    %v121 = vrot.slane %v116, %v120
    %vm123 = vcmp.ge.f32.partialorder %v83, %v121
    %v124 = vcombine.low %v55, %v56
    %v125 = vcombine.low %v57, %v58
    %v127 = vunpack.c.l.s4 1966171168
    %v128 = vunpack.c.0.s8 %v127
    %v129 = vlaneseq
    %v130 = vshrl.u32 %v129, 7
    %v131 = vsub.s32 %v128, %v130
    %v132 = vrot.slane %v124, %v131
    %v134 = vunpack.c.l.s4 1966171168
    %v135 = vunpack.c.0.s8 %v134
    %v136 = vlaneseq
    %v137 = vshrl.u32 %v136, 7
    %v138 = vsub.s32 %v135, %v137
    %v139 = vrot.slane %v125, %v138
    %v140 = vcombine.low %v132, %v139
    %v142 = vunpack.c.l.s4 1966171168
    %v143 = vunpack.c.0.s8 %v142
    %v144 = vlaneseq
    %v145 = vshrl.u32 %v144, 7
    %v146 = vsub.s32 %v143, %v145
    %v147 = vrot.slane %v140, %v146
    %v148 = vsel %vm123, %v147, 512
    %v149 = vlaneseq
    %v150 = vshrl.u32 %v149, 7
    %v151 = vsub.s32 0, %v150
    %v152 = vrot.slane %v148, %v151
    %v153 = vlaneseq
    %v154 = vshrl.u32 %v153, 7
    %v155 = vsub.s32 1, %v154
    %v156 = vrot.slane %v148, %v155
    %v157 = vlaneseq
    %v158 = vshrl.u32 %v157, 7
    %v159 = vsub.s32 2, %v158
    %v160 = vrot.slane %v148, %v159
    %v161 = vlaneseq
    %v162 = vshrl.u32 %v161, 7
    %v163 = vsub.s32 3, %v162
    %v164 = vrot.slane %v148, %v163
    %v165 = vsel %vm107, %v152, 2147483647
    %v166 = vsel %vm107, %v156, 2147483647
    %v167 = vsel %vm107, %v160, 2147483647
    %v168 = vsel %vm107, %v164, 2147483647
    %vm169 = vcmp.lt.s32.totalorder %v165, %v166
    %v170 = vsel %vm169, %v165, %v166
    %vm171 = vcmp.lt.s32.totalorder %v167, %v168
    %v172 = vsel %vm171, %v167, %v168
    %vm173 = vcmp.lt.s32.totalorder %v170, %v172
    %v174 = vsel %vm173, %v170, %v172
    %v175 = vand.u32 %v174, 65535
    %v176 = vshra.s32 %v174, 16
    %v177 = vcvt.s32.f32 %v175
    %v178 = vcvt.s32.f32 %v176
    %179 = vmin.xlane.f32.xlu0 %v178
    %v180 = vpop.xlane.xlu0 %179
    %vm181 = vcmp.eq.f32.partialorder %v178, %v180
    %v182 = vsel %vm181, %v177, inf
    %183 = vmin.xlane.f32.xlu0 %v182
    %v184 = vpop.xlane.xlu0 %183
    %v185 = vcvt.f32.s32 %v184
    %v186 = vcvt.f32.s32 %v180
    %v187 = vshll.u32 %v186, 16
    %v188 = vadd.s32 %v187, %v185
    %s189 = sld [smem:[#allocation2 + $0x80]]
    %s190 = sld [smem:[#allocation2 + $0x81]]
    %s191 = sld [smem:[#allocation2 + $0x82]]
    %s192 = sld [smem:[#allocation2 + $0x83]]
    %s193 = ssub.f32 %s191, %s189
    %s194 = ssub.f32 %s192, %s190
    %s195 = smul.f32 %s193, %s194
    %v196 = vstv %s189
    %v197 = vmax.f32 %v44, %v196
    %v198 = vstv %s190
    %v199 = vmax.f32 %v46, %v198
    %v200 = vstv %s191
    %v201 = vmin.f32 %v48, %v200
    %v202 = vstv %s192
    %v203 = vmin.f32 %v50, %v202
    %v204 = vsub.f32 %v201, %v197
    %v205 = vmax.f32 %v204, 0.0
    %v206 = vsub.f32 %v203, %v199
    %v207 = vmax.f32 %v206, 0.0
    %v208 = vmul.f32 %v205, %v207
    %v209 = vstv %s195
    %v210 = vadd.f32 %v53, %v209
    %v211 = vsub.f32 %v210, %v208
    %v212 = vrcp.pop %v211
    %v213 = vmul.f32 %v208, %v212
    %vm214 = vcmp.gt.f32.partialorder %v213, %v85
    %v215 = vsel %vm214, 1, 0
    %v216 = vsel %vm214, %v213, %v85
    %v218 = vlaneseq
    %v219 = vshrl.u32 %v218, 7
    %v220 = vsub.s32 0, %v219
    %v221 = vrot.slane %v213, %v220
    %v222 = vlaneseq
    %v223 = vshrl.u32 %v222, 7
    %v224 = vsub.s32 1, %v223
    %v225 = vrot.slane %v213, %v224
    %v226 = vlaneseq
    %v227 = vshrl.u32 %v226, 7
    %v228 = vsub.s32 2, %v227
    %v229 = vrot.slane %v213, %v228
    %v230 = vlaneseq
    %v231 = vshrl.u32 %v230, 7
    %v232 = vsub.s32 3, %v231
    %v233 = vrot.slane %v213, %v232
    %v238 = vsel %vm107, %v221, -inf
    %v239 = vsel %vm107, %v225, -inf
    %v240 = vsel %vm107, %v229, -inf
    %v241 = vsel %vm107, %v233, -inf
    %v242 = vmax.f32 %v238, %v239
    %v243 = vmax.f32 %v240, %v241
    %v244 = vmax.f32 %v242, %v243
    %245 = vmax.xlane.f32.xlu0 %v244
    %v246 = vpop.xlane.xlu0 %245
    %v248 = vlaneseq
    %v249 = vshrl.u32 %v248, 7
    %v250 = vsub.s32 0, %v249
    %v251 = vrot.slane %v246, %v250
    %vm253 = vcmp.ge.f32.partialorder %v213, %v251
    %v254 = vsel %vm253, %v147, 512
    %v255 = vlaneseq
    %v256 = vshrl.u32 %v255, 7
    %v257 = vsub.s32 0, %v256
    %v258 = vrot.slane %v254, %v257
    %v259 = vlaneseq
    %v260 = vshrl.u32 %v259, 7
    %v261 = vsub.s32 1, %v260
    %v262 = vrot.slane %v254, %v261
    %v263 = vlaneseq
    %v264 = vshrl.u32 %v263, 7
    %v265 = vsub.s32 2, %v264
    %v266 = vrot.slane %v254, %v265
    %v267 = vlaneseq
    %v268 = vshrl.u32 %v267, 7
    %v269 = vsub.s32 3, %v268
    %v270 = vrot.slane %v254, %v269
    %v271 = vsel %vm107, %v258, 2147483647
    %v272 = vsel %vm107, %v262, 2147483647
    %v273 = vsel %vm107, %v266, 2147483647
    %v274 = vsel %vm107, %v270, 2147483647
    %vm275 = vcmp.lt.s32.totalorder %v271, %v272
    %v276 = vsel %vm275, %v271, %v272
    %vm277 = vcmp.lt.s32.totalorder %v273, %v274
    %v278 = vsel %vm277, %v273, %v274
    %vm279 = vcmp.lt.s32.totalorder %v276, %v278
    %v280 = vsel %vm279, %v276, %v278
    %v281 = vand.u32 %v280, 65535
    %v282 = vshra.s32 %v280, 16
    %v283 = vcvt.s32.f32 %v281
    %v284 = vcvt.s32.f32 %v282
    %285 = vmin.xlane.f32.xlu0 %v284
    %v286 = vpop.xlane.xlu0 %285
    %vm287 = vcmp.eq.f32.partialorder %v284, %v286
    %v288 = vsel %vm287, %v283, inf
    %289 = vmin.xlane.f32.xlu0 %v288
    %v290 = vpop.xlane.xlu0 %289
    %v291 = vcvt.f32.s32 %v290
    %v292 = vcvt.f32.s32 %v286
    %v293 = vshll.u32 %v292, 16
    %v294 = vadd.s32 %v293, %v291
    %s295 = sld [smem:[#allocation2 + $0x100]]
    %s296 = sld [smem:[#allocation2 + $0x101]]
    %s297 = sld [smem:[#allocation2 + $0x102]]
    %s298 = sld [smem:[#allocation2 + $0x103]]
    %s299 = ssub.f32 %s297, %s295
    %s300 = ssub.f32 %s298, %s296
    %s301 = smul.f32 %s299, %s300
    %v302 = vstv %s295
    %v303 = vmax.f32 %v44, %v302
    %v304 = vstv %s296
    %v305 = vmax.f32 %v46, %v304
    %v306 = vstv %s297
    %v307 = vmin.f32 %v48, %v306
    %v308 = vstv %s298
    %v309 = vmin.f32 %v50, %v308
    %v310 = vsub.f32 %v307, %v303
    %v311 = vmax.f32 %v310, 0.0
    %v312 = vsub.f32 %v309, %v305
    %v313 = vmax.f32 %v312, 0.0
    %v314 = vmul.f32 %v311, %v313
    %v315 = vstv %s301
    %v316 = vadd.f32 %v53, %v315
    %v317 = vsub.f32 %v316, %v314
    %v318 = vrcp.pop %v317
    %v319 = vmul.f32 %v314, %v318
    %vm320 = vcmp.gt.f32.partialorder %v319, %v216
    %v321 = vsel %vm320, 2, %v215
    %v322 = vsel %vm320, %v319, %v216
    %v324 = vlaneseq
    %v325 = vshrl.u32 %v324, 7
    %v326 = vsub.s32 0, %v325
    %v327 = vrot.slane %v319, %v326
    %v328 = vlaneseq
    %v329 = vshrl.u32 %v328, 7
    %v330 = vsub.s32 1, %v329
    %v331 = vrot.slane %v319, %v330
    %v332 = vlaneseq
    %v333 = vshrl.u32 %v332, 7
    %v334 = vsub.s32 2, %v333
    %v335 = vrot.slane %v319, %v334
    %v336 = vlaneseq
    %v337 = vshrl.u32 %v336, 7
    %v338 = vsub.s32 3, %v337
    %v339 = vrot.slane %v319, %v338
    %v344 = vsel %vm107, %v327, -inf
    %v345 = vsel %vm107, %v331, -inf
    %v346 = vsel %vm107, %v335, -inf
    %v347 = vsel %vm107, %v339, -inf
    %v348 = vmax.f32 %v344, %v345
    %v349 = vmax.f32 %v346, %v347
    %v350 = vmax.f32 %v348, %v349
    %351 = vmax.xlane.f32.xlu0 %v350
    %v352 = vpop.xlane.xlu0 %351
    %v354 = vlaneseq
    %v355 = vshrl.u32 %v354, 7
    %v356 = vsub.s32 0, %v355
    %v357 = vrot.slane %v352, %v356
    %vm359 = vcmp.ge.f32.partialorder %v319, %v357
    %v360 = vsel %vm359, %v147, 512
    %v361 = vlaneseq
    %v362 = vshrl.u32 %v361, 7
    %v363 = vsub.s32 0, %v362
    %v364 = vrot.slane %v360, %v363
    %v365 = vlaneseq
    %v366 = vshrl.u32 %v365, 7
    %v367 = vsub.s32 1, %v366
    %v368 = vrot.slane %v360, %v367
    %v369 = vlaneseq
    %v370 = vshrl.u32 %v369, 7
    %v371 = vsub.s32 2, %v370
    %v372 = vrot.slane %v360, %v371
    %v373 = vlaneseq
    %v374 = vshrl.u32 %v373, 7
    %v375 = vsub.s32 3, %v374
    %v376 = vrot.slane %v360, %v375
    %v377 = vsel %vm107, %v364, 2147483647
    %v378 = vsel %vm107, %v368, 2147483647
    %v379 = vsel %vm107, %v372, 2147483647
    %v380 = vsel %vm107, %v376, 2147483647
    %vm381 = vcmp.lt.s32.totalorder %v377, %v378
    %v382 = vsel %vm381, %v377, %v378
    %vm383 = vcmp.lt.s32.totalorder %v379, %v380
    %v384 = vsel %vm383, %v379, %v380
    %vm385 = vcmp.lt.s32.totalorder %v382, %v384
    %v386 = vsel %vm385, %v382, %v384
    %v387 = vand.u32 %v386, 65535
    %v388 = vshra.s32 %v386, 16
    %v389 = vcvt.s32.f32 %v387
    %v390 = vcvt.s32.f32 %v388
    %391 = vmin.xlane.f32.xlu0 %v390
    %v392 = vpop.xlane.xlu0 %391
    %vm393 = vcmp.eq.f32.partialorder %v390, %v392
    %v394 = vsel %vm393, %v389, inf
    %395 = vmin.xlane.f32.xlu0 %v394
    %v396 = vpop.xlane.xlu0 %395
    %v397 = vcvt.f32.s32 %v396
    %v398 = vcvt.f32.s32 %v392
    %v399 = vshll.u32 %v398, 16
    %v400 = vadd.s32 %v399, %v397
    %s401 = sld [smem:[#allocation2 + $0x180]]
    %s402 = sld [smem:[#allocation2 + $0x181]]
    %s403 = sld [smem:[#allocation2 + $0x182]]
    %s404 = sld [smem:[#allocation2 + $0x183]]
    %s405 = ssub.f32 %s403, %s401
    %s406 = ssub.f32 %s404, %s402
    %s407 = smul.f32 %s405, %s406
    %v408 = vstv %s401
    %v409 = vmax.f32 %v44, %v408
    %v410 = vstv %s402
    %v411 = vmax.f32 %v46, %v410
    %v412 = vstv %s403
    %v413 = vmin.f32 %v48, %v412
    %v414 = vstv %s404
    %v415 = vmin.f32 %v50, %v414
    %v416 = vsub.f32 %v413, %v409
    %v417 = vmax.f32 %v416, 0.0
    %v418 = vsub.f32 %v415, %v411
    %v419 = vmax.f32 %v418, 0.0
    %v420 = vmul.f32 %v417, %v419
    %v421 = vstv %s407
    %v422 = vadd.f32 %v53, %v421
    %v423 = vsub.f32 %v422, %v420
    %v424 = vrcp.pop %v423
    %v425 = vmul.f32 %v420, %v424
    %vm426 = vcmp.gt.f32.partialorder %v425, %v322
    %v427 = vsel %vm426, 3, %v321
    %v428 = vsel %vm426, %v425, %v322
    %v430 = vlaneseq
    %v431 = vshrl.u32 %v430, 7
    %v432 = vsub.s32 0, %v431
    %v433 = vrot.slane %v425, %v432
    %v434 = vlaneseq
    %v435 = vshrl.u32 %v434, 7
    %v436 = vsub.s32 1, %v435
    %v437 = vrot.slane %v425, %v436
    %v438 = vlaneseq
    %v439 = vshrl.u32 %v438, 7
    %v440 = vsub.s32 2, %v439
    %v441 = vrot.slane %v425, %v440
    %v442 = vlaneseq
    %v443 = vshrl.u32 %v442, 7
    %v444 = vsub.s32 3, %v443
    %v445 = vrot.slane %v425, %v444
    %v450 = vsel %vm107, %v433, -inf
    %v451 = vsel %vm107, %v437, -inf
    %v452 = vsel %vm107, %v441, -inf
    %v453 = vsel %vm107, %v445, -inf
    %v454 = vmax.f32 %v450, %v451
    %v455 = vmax.f32 %v452, %v453
    %v456 = vmax.f32 %v454, %v455
    %457 = vmax.xlane.f32.xlu0 %v456
    %v458 = vpop.xlane.xlu0 %457
    %v460 = vlaneseq
    %v461 = vshrl.u32 %v460, 7
    %v462 = vsub.s32 0, %v461
    %v463 = vrot.slane %v458, %v462
    %vm465 = vcmp.ge.f32.partialorder %v425, %v463
    %v466 = vsel %vm465, %v147, 512
    %v467 = vlaneseq
    %v468 = vshrl.u32 %v467, 7
    %v469 = vsub.s32 0, %v468
    %v470 = vrot.slane %v466, %v469
    %v471 = vlaneseq
    %v472 = vshrl.u32 %v471, 7
    %v473 = vsub.s32 1, %v472
    %v474 = vrot.slane %v466, %v473
    %v475 = vlaneseq
    %v476 = vshrl.u32 %v475, 7
    %v477 = vsub.s32 2, %v476
    %v478 = vrot.slane %v466, %v477
    %v479 = vlaneseq
    %v480 = vshrl.u32 %v479, 7
    %v481 = vsub.s32 3, %v480
    %v482 = vrot.slane %v466, %v481
    %v483 = vsel %vm107, %v470, 2147483647
    %v484 = vsel %vm107, %v474, 2147483647
    %v485 = vsel %vm107, %v478, 2147483647
    %v486 = vsel %vm107, %v482, 2147483647
    %vm487 = vcmp.lt.s32.totalorder %v483, %v484
    %v488 = vsel %vm487, %v483, %v484
    %vm489 = vcmp.lt.s32.totalorder %v485, %v486
    %v490 = vsel %vm489, %v485, %v486
    %vm491 = vcmp.lt.s32.totalorder %v488, %v490
    %v492 = vsel %vm491, %v488, %v490
    %v493 = vand.u32 %v492, 65535
    %v494 = vshra.s32 %v492, 16
    %v495 = vcvt.s32.f32 %v493
    %v496 = vcvt.s32.f32 %v494
    %497 = vmin.xlane.f32.xlu0 %v496
    %v498 = vpop.xlane.xlu0 %497
    %vm499 = vcmp.eq.f32.partialorder %v496, %v498
    %v500 = vsel %vm499, %v495, inf
    %501 = vmin.xlane.f32.xlu0 %v500
    %v502 = vpop.xlane.xlu0 %501
    %v503 = vcvt.f32.s32 %v502
    %v504 = vcvt.f32.s32 %v498
    %v505 = vshll.u32 %v504, 16
    %v506 = vadd.s32 %v505, %v503
    %vm507 = vcmp.eq.s32.totalorder %v55, %v188
    %vm508 = vcmp.eq.s32.totalorder %v56, %v188
    %vm509 = vcmp.eq.s32.totalorder %v57, %v188
    %vm510 = vcmp.eq.s32.totalorder %v58, %v188
    %v512 = vlaneseq
    %v513 = vshrl.u32 %v512, 7
    %v514 = vsub.s32 0, %v513
    %v515 = vrot.slane %v428, %v514
    %v516 = vlaneseq
    %v517 = vshrl.u32 %v516, 7
    %v518 = vsub.s32 1, %v517
    %v519 = vrot.slane %v428, %v518
    %v520 = vlaneseq
    %v521 = vshrl.u32 %v520, 7
    %v522 = vsub.s32 2, %v521
    %v523 = vrot.slane %v428, %v522
    %v524 = vlaneseq
    %v525 = vshrl.u32 %v524, 7
    %v526 = vsub.s32 3, %v525
    %v527 = vrot.slane %v428, %v526
    %v532 = vsel %vm507, 2.0, %v515
    %v533 = vsel %vm508, 2.0, %v519
    %v534 = vsel %vm509, 2.0, %v523
    %v535 = vsel %vm510, 2.0, %v527
    %v536 = vlaneseq
    %v537 = vshrl.u32 %v536, 7
    %v538 = vsub.s32 0, %v537
    %v539 = vrot.slane %v427, %v538
    %v540 = vlaneseq
    %v541 = vshrl.u32 %v540, 7
    %v542 = vsub.s32 1, %v541
    %v543 = vrot.slane %v427, %v542
    %v544 = vlaneseq
    %v545 = vshrl.u32 %v544, 7
    %v546 = vsub.s32 2, %v545
    %v547 = vrot.slane %v427, %v546
    %v548 = vlaneseq
    %v549 = vshrl.u32 %v548, 7
    %v550 = vsub.s32 3, %v549
    %v551 = vrot.slane %v427, %v550
    %v552 = vsel %vm507, 0, %v539
    %v553 = vsel %vm508, 0, %v543
    %v554 = vsel %vm509, 0, %v547
    %v555 = vsel %vm510, 0, %v551
    %vm556 = vcmp.eq.s32.totalorder %v55, %v294
    %vm557 = vcmp.eq.s32.totalorder %v56, %v294
    %vm558 = vcmp.eq.s32.totalorder %v57, %v294
    %vm559 = vcmp.eq.s32.totalorder %v58, %v294
    %v560 = vsel %vm556, 2.0, %v532
    %v561 = vsel %vm557, 2.0, %v533
    %v562 = vsel %vm558, 2.0, %v534
    %v563 = vsel %vm559, 2.0, %v535
    %v564 = vsel %vm556, 1, %v552
    %v565 = vsel %vm557, 1, %v553
    %v566 = vsel %vm558, 1, %v554
    %v567 = vsel %vm559, 1, %v555
    %vm568 = vcmp.eq.s32.totalorder %v55, %v400
    %vm569 = vcmp.eq.s32.totalorder %v56, %v400
    %vm570 = vcmp.eq.s32.totalorder %v57, %v400
    %vm571 = vcmp.eq.s32.totalorder %v58, %v400
    %v572 = vsel %vm568, 2.0, %v560
    %v573 = vsel %vm569, 2.0, %v561
    %v574 = vsel %vm570, 2.0, %v562
    %v575 = vsel %vm571, 2.0, %v563
    %v576 = vsel %vm568, 2, %v564
    %v577 = vsel %vm569, 2, %v565
    %v578 = vsel %vm570, 2, %v566
    %v579 = vsel %vm571, 2, %v567
    %vm580 = vcmp.eq.s32.totalorder %v55, %v506
    %vm581 = vcmp.eq.s32.totalorder %v56, %v506
    %vm582 = vcmp.eq.s32.totalorder %v57, %v506
    %vm583 = vcmp.eq.s32.totalorder %v58, %v506
    %v584 = vsel %vm580, 2.0, %v572
    %v585 = vsel %vm581, 2.0, %v573
    %v586 = vsel %vm582, 2.0, %v574
    %v587 = vsel %vm583, 2.0, %v575
    %v588 = vsel %vm580, 3, %v576
    %v589 = vsel %vm581, 3, %v577
    %v590 = vsel %vm582, 3, %v578
    %v591 = vsel %vm583, 3, %v579
    %vm592 = vcmp.eq.s32.totalorder %v588, 0
    %vm593 = vcmp.eq.s32.totalorder %v589, 0
    %vm594 = vcmp.eq.s32.totalorder %v590, 0
    %vm595 = vcmp.eq.s32.totalorder %v591, 0
    %v596 = vsel %vm592, %v66, 0.0
    %v597 = vsel %vm593, %v66, 0.0
    %v598 = vsel %vm594, %v66, 0.0
    %v599 = vsel %vm595, %v66, 0.0
    %v600 = vsel %vm592, %v68, 0.0
    %v601 = vsel %vm593, %v68, 0.0
    %v602 = vsel %vm594, %v68, 0.0
    %v603 = vsel %vm595, %v68, 0.0
    %v604 = vsel %vm592, %v70, 0.0
    %v605 = vsel %vm593, %v70, 0.0
    %v606 = vsel %vm594, %v70, 0.0
    %v607 = vsel %vm595, %v70, 0.0
    %v608 = vsel %vm592, %v72, 0.0
    %v609 = vsel %vm593, %v72, 0.0
    %v610 = vsel %vm594, %v72, 0.0
    %v611 = vsel %vm595, %v72, 0.0
    %s612 = sld [smem:[#allocation4]]
    %s613 = sadd.s32 %s612, 1
    %v614 = vstv %s613
    %v615 = vsel %vm592, %v614, 0
    %v616 = vsel %vm593, %v614, 0
    %v617 = vsel %vm594, %v614, 0
    %v618 = vsel %vm595, %v614, 0
    %vm619 = vcmp.eq.s32.totalorder %v588, 1
    %vm620 = vcmp.eq.s32.totalorder %v589, 1
    %vm621 = vcmp.eq.s32.totalorder %v590, 1
    %vm622 = vcmp.eq.s32.totalorder %v591, 1
    %v623 = vsel %vm619, %v196, %v596
    %v624 = vsel %vm620, %v196, %v597
    %v625 = vsel %vm621, %v196, %v598
    %v626 = vsel %vm622, %v196, %v599
    %v627 = vsel %vm619, %v198, %v600
    %v628 = vsel %vm620, %v198, %v601
    %v629 = vsel %vm621, %v198, %v602
    %v630 = vsel %vm622, %v198, %v603
    %v631 = vsel %vm619, %v200, %v604
    %v632 = vsel %vm620, %v200, %v605
    %v633 = vsel %vm621, %v200, %v606
    %v634 = vsel %vm622, %v200, %v607
    %v635 = vsel %vm619, %v202, %v608
    %v636 = vsel %vm620, %v202, %v609
    %v637 = vsel %vm621, %v202, %v610
    %v638 = vsel %vm622, %v202, %v611
    %s639 = sld [smem:[#allocation4 + $0x1]]
    %s640 = sadd.s32 %s639, 1
    %v641 = vstv %s640
    %v642 = vsel %vm619, %v641, %v615
    %v643 = vsel %vm620, %v641, %v616
    %v644 = vsel %vm621, %v641, %v617
    %v645 = vsel %vm622, %v641, %v618
    %vm646 = vcmp.eq.s32.totalorder %v588, 2
    %vm647 = vcmp.eq.s32.totalorder %v589, 2
    %vm648 = vcmp.eq.s32.totalorder %v590, 2
    %vm649 = vcmp.eq.s32.totalorder %v591, 2
    %v650 = vsel %vm646, %v302, %v623
    %v651 = vsel %vm647, %v302, %v624
    %v652 = vsel %vm648, %v302, %v625
    %v653 = vsel %vm649, %v302, %v626
    %v654 = vsel %vm646, %v304, %v627
    %v655 = vsel %vm647, %v304, %v628
    %v656 = vsel %vm648, %v304, %v629
    %v657 = vsel %vm649, %v304, %v630
    %v658 = vsel %vm646, %v306, %v631
    %v659 = vsel %vm647, %v306, %v632
    %v660 = vsel %vm648, %v306, %v633
    %v661 = vsel %vm649, %v306, %v634
    %v662 = vsel %vm646, %v308, %v635
    %v663 = vsel %vm647, %v308, %v636
    %v664 = vsel %vm648, %v308, %v637
    %v665 = vsel %vm649, %v308, %v638
    %s666 = sld [smem:[#allocation4 + $0x2]]
    %s667 = sadd.s32 %s666, 1
    %v668 = vstv %s667
    %v669 = vsel %vm646, %v668, %v642
    %v670 = vsel %vm647, %v668, %v643
    %v671 = vsel %vm648, %v668, %v644
    %v672 = vsel %vm649, %v668, %v645
    %vm673 = vcmp.eq.s32.totalorder %v588, 3
    %vm674 = vcmp.eq.s32.totalorder %v589, 3
    %vm675 = vcmp.eq.s32.totalorder %v590, 3
    %vm676 = vcmp.eq.s32.totalorder %v591, 3
    %v677 = vsel %vm673, %v408, %v650
    %v678 = vsel %vm674, %v408, %v651
    %v679 = vsel %vm675, %v408, %v652
    %v680 = vsel %vm676, %v408, %v653
    %v681 = vsel %vm673, %v410, %v654
    %v682 = vsel %vm674, %v410, %v655
    %v683 = vsel %vm675, %v410, %v656
    %v684 = vsel %vm676, %v410, %v657
    %v685 = vsel %vm673, %v412, %v658
    %v686 = vsel %vm674, %v412, %v659
    %v687 = vsel %vm675, %v412, %v660
    %v688 = vsel %vm676, %v412, %v661
    %v689 = vsel %vm673, %v414, %v662
    %v690 = vsel %vm674, %v414, %v663
    %v691 = vsel %vm675, %v414, %v664
    %v692 = vsel %vm676, %v414, %v665
    %s693 = sld [smem:[#allocation4 + $0x3]]
    %s694 = sadd.s32 %s693, 1
    %v695 = vstv %s694
    %v696 = vsel %vm673, %v695, %v669
    %v697 = vsel %vm674, %v695, %v670
    %v698 = vsel %vm675, %v695, %v671
    %v699 = vsel %vm676, %v695, %v672
    %vm700 = vcmp.lt.f32.partialorder %v584, 0.5
    %vm701 = vcmp.lt.f32.partialorder %v585, 0.5
    %vm702 = vcmp.lt.f32.partialorder %v586, 0.5
    %vm703 = vcmp.lt.f32.partialorder %v587, 0.5
    %v704 = vsel %vm700, 0, %v696
    %v705 = vsel %vm701, 0, %v697
    %v706 = vsel %vm702, 0, %v698
    %v707 = vsel %vm703, 0, %v699
    %v708 = vcombine.low %v704, %v705
    %v709 = vcombine.low %v706, %v707
    %v711 = vunpack.c.l.s4 1966171168
    %v712 = vunpack.c.0.s8 %v711
    %v713 = vlaneseq
    %v714 = vshrl.u32 %v713, 7
    %v715 = vsub.s32 %v712, %v714
    %v716 = vrot.slane %v708, %v715
    %v718 = vunpack.c.l.s4 1966171168
    %v719 = vunpack.c.0.s8 %v718
    %v720 = vlaneseq
    %v721 = vshrl.u32 %v720, 7
    %v722 = vsub.s32 %v719, %v721
    %v723 = vrot.slane %v709, %v722
    %v724 = vcombine.low %v716, %v723
    %v726 = vunpack.c.l.s4 1966171168
    %v727 = vunpack.c.0.s8 %v726
    %v728 = vlaneseq
    %v729 = vshrl.u32 %v728, 7
    %v730 = vsub.s32 %v727, %v729
    %v731 = vrot.slane %v724, %v730
    %v732 = vlaneseq
    %vm733 = vcmp.ge.s32.totalorder %v732, 0
    %vm734 = vcmp.lt.s32.totalorder %v732, 512
    %vm735 = vmand %vm733, %vm734
    %736 = vst.msk [vmem:[%s5] sm:$0xf] %vm735, %v731
    %v737 = vld [vmem:[%s3] ss:$4 sm:$0xf]
    %s738 = scalar_lea.vmem %s3, 1
    %v739 = vld [vmem:[%s738] ss:$4 sm:$0xf]
    %s740 = scalar_lea.vmem %s3, 2
    %v741 = vld [vmem:[%s740] ss:$4 sm:$0xf]
    %s742 = scalar_lea.vmem %s3, 3
    %v743 = vld [vmem:[%s742] ss:$4 sm:$0xf]
    %v744 = vadd.f32 %v677, %v685
    %v745 = vadd.f32 %v678, %v686
    %v746 = vadd.f32 %v679, %v687
    %v747 = vadd.f32 %v680, %v688
    %v748 = vmul.f32 %v744, 0.5
    %v749 = vmul.f32 %v745, 0.5
    %v750 = vmul.f32 %v746, 0.5
    %v751 = vmul.f32 %v747, 0.5
    %v753 = vlaneseq
    %v754 = vshrl.u32 %v753, 7
    %v755 = vsub.s32 0, %v754
    %v756 = vrot.slane %v737, %v755
    %v757 = vlaneseq
    %v758 = vshrl.u32 %v757, 7
    %v759 = vsub.s32 1, %v758
    %v760 = vrot.slane %v737, %v759
    %v761 = vlaneseq
    %v762 = vshrl.u32 %v761, 7
    %v763 = vsub.s32 2, %v762
    %v764 = vrot.slane %v737, %v763
    %v765 = vlaneseq
    %v766 = vshrl.u32 %v765, 7
    %v767 = vsub.s32 3, %v766
    %v768 = vrot.slane %v737, %v767
    %v773 = vsub.f32 %v748, %v756
    %v774 = vsub.f32 %v749, %v760
    %v775 = vsub.f32 %v750, %v764
    %v776 = vsub.f32 %v751, %v768
    %v777 = vmul.f32 %v741, 0.1
    %v779 = vlaneseq
    %v780 = vshrl.u32 %v779, 7
    %v781 = vsub.s32 0, %v780
    %v782 = vrot.slane %v777, %v781
    %v783 = vlaneseq
    %v784 = vshrl.u32 %v783, 7
    %v785 = vsub.s32 1, %v784
    %v786 = vrot.slane %v777, %v785
    %v787 = vlaneseq
    %v788 = vshrl.u32 %v787, 7
    %v789 = vsub.s32 2, %v788
    %v790 = vrot.slane %v777, %v789
    %v791 = vlaneseq
    %v792 = vshrl.u32 %v791, 7
    %v793 = vsub.s32 3, %v792
    %v794 = vrot.slane %v777, %v793
    %v799 = vrcp.pop %v782
    %v800 = vmul.f32 %v773, %v799
    %v801 = vrcp.pop %v786
    %v802 = vmul.f32 %v774, %v801
    %v803 = vrcp.pop %v790
    %v804 = vmul.f32 %v775, %v803
    %v805 = vrcp.pop %v794
    %v806 = vmul.f32 %v776, %v805
    %v811 = vcombine.low %v800, %v802
    %v812 = vcombine.low %v804, %v806
    %v814 = vunpack.c.l.s4 1966171168
    %v815 = vunpack.c.0.s8 %v814
    %v816 = vlaneseq
    %v817 = vshrl.u32 %v816, 7
    %v818 = vsub.s32 %v815, %v817
    %v819 = vrot.slane %v811, %v818
    %v821 = vunpack.c.l.s4 1966171168
    %v822 = vunpack.c.0.s8 %v821
    %v823 = vlaneseq
    %v824 = vshrl.u32 %v823, 7
    %v825 = vsub.s32 %v822, %v824
    %v826 = vrot.slane %v812, %v825
    %v827 = vcombine.low %v819, %v826
    %v829 = vunpack.c.l.s4 1966171168
    %v830 = vunpack.c.0.s8 %v829
    %v831 = vlaneseq
    %v832 = vshrl.u32 %v831, 7
    %v833 = vsub.s32 %v830, %v832
    %v834 = vrot.slane %v827, %v833
    %836 = vst.msk [vmem:[%s4] ss:$4 sm:$0xf] %vm735, %v834
    %v837 = vadd.f32 %v681, %v689
    %v838 = vadd.f32 %v682, %v690
    %v839 = vadd.f32 %v683, %v691
    %v840 = vadd.f32 %v684, %v692
    %v841 = vmul.f32 %v837, 0.5
    %v842 = vmul.f32 %v838, 0.5
    %v843 = vmul.f32 %v839, 0.5
    %v844 = vmul.f32 %v840, 0.5
    %v846 = vlaneseq
    %v847 = vshrl.u32 %v846, 7
    %v848 = vsub.s32 0, %v847
    %v849 = vrot.slane %v739, %v848
    %v850 = vlaneseq
    %v851 = vshrl.u32 %v850, 7
    %v852 = vsub.s32 1, %v851
    %v853 = vrot.slane %v739, %v852
    %v854 = vlaneseq
    %v855 = vshrl.u32 %v854, 7
    %v856 = vsub.s32 2, %v855
    %v857 = vrot.slane %v739, %v856
    %v858 = vlaneseq
    %v859 = vshrl.u32 %v858, 7
    %v860 = vsub.s32 3, %v859
    %v861 = vrot.slane %v739, %v860
    %v866 = vsub.f32 %v841, %v849
    %v867 = vsub.f32 %v842, %v853
    %v868 = vsub.f32 %v843, %v857
    %v869 = vsub.f32 %v844, %v861
    %v870 = vmul.f32 %v743, 0.1
    %v872 = vlaneseq
    %v873 = vshrl.u32 %v872, 7
    %v874 = vsub.s32 0, %v873
    %v875 = vrot.slane %v870, %v874
    %v876 = vlaneseq
    %v877 = vshrl.u32 %v876, 7
    %v878 = vsub.s32 1, %v877
    %v879 = vrot.slane %v870, %v878
    %v880 = vlaneseq
    %v881 = vshrl.u32 %v880, 7
    %v882 = vsub.s32 2, %v881
    %v883 = vrot.slane %v870, %v882
    %v884 = vlaneseq
    %v885 = vshrl.u32 %v884, 7
    %v886 = vsub.s32 3, %v885
    %v887 = vrot.slane %v870, %v886
    %v892 = vrcp.pop %v875
    %v893 = vmul.f32 %v866, %v892
    %v894 = vrcp.pop %v879
    %v895 = vmul.f32 %v867, %v894
    %v896 = vrcp.pop %v883
    %v897 = vmul.f32 %v868, %v896
    %v898 = vrcp.pop %v887
    %v899 = vmul.f32 %v869, %v898
    %v904 = vcombine.low %v893, %v895
    %v905 = vcombine.low %v897, %v899
    %v907 = vunpack.c.l.s4 1966171168
    %v908 = vunpack.c.0.s8 %v907
    %v909 = vlaneseq
    %v910 = vshrl.u32 %v909, 7
    %v911 = vsub.s32 %v908, %v910
    %v912 = vrot.slane %v904, %v911
    %v914 = vunpack.c.l.s4 1966171168
    %v915 = vunpack.c.0.s8 %v914
    %v916 = vlaneseq
    %v917 = vshrl.u32 %v916, 7
    %v918 = vsub.s32 %v915, %v917
    %v919 = vrot.slane %v905, %v918
    %v920 = vcombine.low %v912, %v919
    %v922 = vunpack.c.l.s4 1966171168
    %v923 = vunpack.c.0.s8 %v922
    %v924 = vlaneseq
    %v925 = vshrl.u32 %v924, 7
    %v926 = vsub.s32 %v923, %v925
    %v927 = vrot.slane %v920, %v926
    %s929 = scalar_lea.vmem %s4, 1
    %930 = vst.msk [vmem:[%s929] ss:$4 sm:$0xf] %vm735, %v927
    %v931 = vsub.f32 %v685, %v677
    %v932 = vsub.f32 %v686, %v678
    %v933 = vsub.f32 %v687, %v679
    %v934 = vsub.f32 %v688, %v680
    %v936 = vlaneseq
    %v937 = vshrl.u32 %v936, 7
    %v938 = vsub.s32 0, %v937
    %v939 = vrot.slane %v741, %v938
    %v940 = vlaneseq
    %v941 = vshrl.u32 %v940, 7
    %v942 = vsub.s32 1, %v941
    %v943 = vrot.slane %v741, %v942
    %v944 = vlaneseq
    %v945 = vshrl.u32 %v944, 7
    %v946 = vsub.s32 2, %v945
    %v947 = vrot.slane %v741, %v946
    %v948 = vlaneseq
    %v949 = vshrl.u32 %v948, 7
    %v950 = vsub.s32 3, %v949
    %v951 = vrot.slane %v741, %v950
    %v956 = vrcp.pop %v939
    %v957 = vmul.f32 %v931, %v956
    %v958 = vrcp.pop %v943
    %v959 = vmul.f32 %v932, %v958
    %v960 = vrcp.pop %v947
    %v961 = vmul.f32 %v933, %v960
    %v962 = vrcp.pop %v951
    %v963 = vmul.f32 %v934, %v962
    %v964 = vlog2.pop %v957
    %v965 = vmul.f32 %v964, 0.6931472
    %v966 = vlog2.pop %v959
    %v967 = vmul.f32 %v966, 0.6931472
    %v968 = vlog2.pop %v961
    %v969 = vmul.f32 %v968, 0.6931472
    %v970 = vlog2.pop %v963
    %v971 = vmul.f32 %v970, 0.6931472
    %v972 = vrcp.pop 0.2
    %v973 = vmul.f32 %v965, %v972
    %v974 = vmul.f32 %v967, %v972
    %v975 = vmul.f32 %v969, %v972
    %v976 = vmul.f32 %v971, %v972
    %v981 = vcombine.low %v973, %v974
    %v982 = vcombine.low %v975, %v976
    %v984 = vunpack.c.l.s4 1966171168
    %v985 = vunpack.c.0.s8 %v984
    %v986 = vlaneseq
    %v987 = vshrl.u32 %v986, 7
    %v988 = vsub.s32 %v985, %v987
    %v989 = vrot.slane %v981, %v988
    %v991 = vunpack.c.l.s4 1966171168
    %v992 = vunpack.c.0.s8 %v991
    %v993 = vlaneseq
    %v994 = vshrl.u32 %v993, 7
    %v995 = vsub.s32 %v992, %v994
    %v996 = vrot.slane %v982, %v995
    %v997 = vcombine.low %v989, %v996
    %v999 = vunpack.c.l.s4 1966171168
    %v1000 = vunpack.c.0.s8 %v999
    %v1001 = vlaneseq
    %v1002 = vshrl.u32 %v1001, 7
    %v1003 = vsub.s32 %v1000, %v1002
    %v1004 = vrot.slane %v997, %v1003
    %s1006 = scalar_lea.vmem %s4, 2
    %1007 = vst.msk [vmem:[%s1006] ss:$4 sm:$0xf] %vm735, %v1004
    %v1008 = vsub.f32 %v689, %v681
    %v1009 = vsub.f32 %v690, %v682
    %v1010 = vsub.f32 %v691, %v683
    %v1011 = vsub.f32 %v692, %v684
    %v1013 = vlaneseq
    %v1014 = vshrl.u32 %v1013, 7
    %v1015 = vsub.s32 0, %v1014
    %v1016 = vrot.slane %v743, %v1015
    %v1017 = vlaneseq
    %v1018 = vshrl.u32 %v1017, 7
    %v1019 = vsub.s32 1, %v1018
    %v1020 = vrot.slane %v743, %v1019
    %v1021 = vlaneseq
    %v1022 = vshrl.u32 %v1021, 7
    %v1023 = vsub.s32 2, %v1022
    %v1024 = vrot.slane %v743, %v1023
    %v1025 = vlaneseq
    %v1026 = vshrl.u32 %v1025, 7
    %v1027 = vsub.s32 3, %v1026
    %v1028 = vrot.slane %v743, %v1027
    %v1033 = vrcp.pop %v1016
    %v1034 = vmul.f32 %v1008, %v1033
    %v1035 = vrcp.pop %v1020
    %v1036 = vmul.f32 %v1009, %v1035
    %v1037 = vrcp.pop %v1024
    %v1038 = vmul.f32 %v1010, %v1037
    %v1039 = vrcp.pop %v1028
    %v1040 = vmul.f32 %v1011, %v1039
    %v1041 = vlog2.pop %v1034
    %v1042 = vmul.f32 %v1041, 0.6931472
    %v1043 = vlog2.pop %v1036
    %v1044 = vmul.f32 %v1043, 0.6931472
    %v1045 = vlog2.pop %v1038
    %v1046 = vmul.f32 %v1045, 0.6931472
    %v1047 = vlog2.pop %v1040
    %v1048 = vmul.f32 %v1047, 0.6931472
    %v1049 = vmul.f32 %v1042, %v972
    %v1050 = vmul.f32 %v1044, %v972
    %v1051 = vmul.f32 %v1046, %v972
    %v1052 = vmul.f32 %v1048, %v972
    %v1057 = vcombine.low %v1049, %v1050
    %v1058 = vcombine.low %v1051, %v1052
    %v1060 = vunpack.c.l.s4 1966171168
    %v1061 = vunpack.c.0.s8 %v1060
    %v1062 = vlaneseq
    %v1063 = vshrl.u32 %v1062, 7
    %v1064 = vsub.s32 %v1061, %v1063
    %v1065 = vrot.slane %v1057, %v1064
    %v1067 = vunpack.c.l.s4 1966171168
    %v1068 = vunpack.c.0.s8 %v1067
    %v1069 = vlaneseq
    %v1070 = vshrl.u32 %v1069, 7
    %v1071 = vsub.s32 %v1068, %v1070
    %v1072 = vrot.slane %v1058, %v1071
    %v1073 = vcombine.low %v1065, %v1072
    %v1075 = vunpack.c.l.s4 1966171168
    %v1076 = vunpack.c.0.s8 %v1075
    %v1077 = vlaneseq
    %v1078 = vshrl.u32 %v1077, 7
    %v1079 = vsub.s32 %v1076, %v1078
    %v1080 = vrot.slane %v1073, %v1079
    %s1082 = scalar_lea.vmem %s4, 3
    %1083 = vst.msk [vmem:[%s1082] ss:$4 sm:$0xf] %vm735, %v1080
    // Predicated region
    $region26: #{multibox_loss.4} parent=1 // pred_check
      _
    $region27: #{multibox_loss.4} parent=1 // pred_check_branch
      %1085 = sbr.rel (0) target = $region29
    $region28: #{multibox_loss.4} parent=1 // pred_region
      _
    $region29: #{multibox_loss.4} parent=1 // pred_fallthru
      _
    // Predicated region
    $region30: #{multibox_loss.4} parent=1 // pred_check
      _
    $region31: #{multibox_loss.4} parent=1 // pred_check_branch
      %1087 = sbr.rel (0) target = $region33
    $region32: #{multibox_loss.4} parent=1 // pred_region
      _
    $region33: #{multibox_loss.4} parent=1 // pred_fallthru
      _
    // Predicated region
    $region34: #{multibox_loss.4} parent=1 // pred_check
      _
    $region35: #{multibox_loss.4} parent=1 // pred_check_branch
      %1089 = sbr.rel (0) target = $region37
    $region36: #{multibox_loss.4} parent=1 // pred_region
      _
    $region37: #{multibox_loss.4} parent=1 // pred_fallthru
      _
    // Predicated region
    $region38: #{multibox_loss.4} parent=1 // pred_check
      _
    $region39: #{multibox_loss.4} parent=1 // pred_check_branch
      %1091 = sbr.rel (0) target = $region41
    $region40: #{multibox_loss.4} parent=1 // pred_region
      _
    $region41: #{multibox_loss.4} parent=1 // pred_fallthru
      _
    %1092 = vsyncpa [#allocation3], 1
    %1093 = vsyncpa [#allocation5], 1

// kernel: multibox_loss.7
$region0: #{multibox_loss.7}
  #allocation0 [shape = 'u32[]', space=smem, size = 0x4, offset = 0x4, fixed_abs, tag = 'smem constant byte address 0x4 - core index']
  #allocation1 [shape = 'u32[144,128]{1,0:T(1,128)}', space=vmem, size = 0x12000, scoped, tag = 'internal scratch']
  %s0 = inlined_call_operand.vmem [shape: f32[1,1024], index: 0, kind: input, shape index: {}]
  %s1 = inlined_call_operand.vmem [shape: f32[1,1024], index: 1, kind: input, shape index: {}]
  %s2 = inlined_call_operand.vmem [shape: f32[1,1024], index: 2, kind: input, shape index: {}]
  %s3 = inlined_call_operand.vmem [shape: f32[1,1024], index: 3, kind: input, shape index: {}]
  %s4 = inlined_call_operand.hbm [shape: f32[1,1], index: 4, kind: output, shape index: {0}]
  %s5 = inlined_call_operand.hbm [shape: f32[1,1], index: 5, kind: output, shape index: {1}]
  %s6 = inlined_call_operand.hbm [shape: f32[1,1], index: 6, kind: output, shape index: {2}]
  %7 = xla_tuple %s4, %s5, %s6
  %s8 = sld [smem:[#allocation0]]
  $region42: #{multibox_loss.7} parent=0
    _
  %s10 = ssub.s32 1, %s8
  %s11 = scalar_select 0, %s10, %s8
  $region1: #{multibox_loss.7} parent=0
    #allocation2 [shape = 'u8[512]{0}', space=vmem, size = 0x400, scoped, tag = 'output window, operand 0, single buffered']
    #allocation3 [shape = 's32[1]{0}', space=sflag, size = 0x4, scoped, tag = 'scoped memory for multibox_loss.7']
    #allocation4 [shape = 'u8[512]{0}', space=vmem, size = 0x400, scoped, tag = 'output window, operand 1, single buffered']
    #allocation5 [shape = 's32[1]{0}', space=sflag, size = 0x4, scoped, tag = 'scoped memory for multibox_loss.7']
    #allocation6 [shape = 'u8[512]{0}', space=vmem, size = 0x400, scoped, tag = 'output window, operand 2, single buffered']
    %12 = vsyncpa [#allocation3], 0
    %13 = vsyncpa [#allocation5], 0
    // Predicated region
    $region2: #{multibox_loss.7} parent=1 // pred_check
      _
    $region3: #{multibox_loss.7} parent=1 // pred_check_branch
      %15 = sbr.rel (0) target = $region5
    $region4: #{multibox_loss.7} parent=1 // pred_region
      _
    $region5: #{multibox_loss.7} parent=1 // pred_fallthru
      _
    // Predicated region
    $region6: #{multibox_loss.7} parent=1 // pred_check
      _
    $region7: #{multibox_loss.7} parent=1 // pred_check_branch
      %17 = sbr.rel (0) target = $region9
    $region8: #{multibox_loss.7} parent=1 // pred_region
      _
    $region9: #{multibox_loss.7} parent=1 // pred_fallthru
      _
    // Predicated region
    $region10: #{multibox_loss.7} parent=1 // pred_check
      _
    $region11: #{multibox_loss.7} parent=1 // pred_check_branch
      %19 = sbr.rel (0) target = $region13
    $region12: #{multibox_loss.7} parent=1 // pred_region
      _
    $region13: #{multibox_loss.7} parent=1 // pred_fallthru
      _
    // Predicated region
    $region14: #{multibox_loss.7} parent=1 // pred_check
      _
    $region15: #{multibox_loss.7} parent=1 // pred_check_branch
      %21 = sbr.rel (0) target = $region17
    $region16: #{multibox_loss.7} parent=1 // pred_region
      _
    $region17: #{multibox_loss.7} parent=1 // pred_fallthru
      _
    %v22 = vld [vmem:[%s2] sm:$0xff]
    %v23 = vld [vmem:[%s0] sm:$0xff]
    %v24 = vmul.f32 %v23, %v22
    %v26 = vlaneseq
    %v27 = vshrl.u32 %v26, 7
    %v28 = vsub.s32 0, %v27
    %v29 = vrot.slane %v24, %v28
    %v30 = vlaneseq
    %v31 = vshrl.u32 %v30, 7
    %v32 = vsub.s32 1, %v31
    %v33 = vrot.slane %v24, %v32
    %v34 = vlaneseq
    %v35 = vshrl.u32 %v34, 7
    %v36 = vsub.s32 2, %v35
    %v37 = vrot.slane %v24, %v36
    %v38 = vlaneseq
    %v39 = vshrl.u32 %v38, 7
    %v40 = vsub.s32 3, %v39
    %v41 = vrot.slane %v24, %v40
    %v42 = vlaneseq
    %v43 = vshrl.u32 %v42, 7
    %v44 = vsub.s32 4, %v43
    %v45 = vrot.slane %v24, %v44
    %v46 = vlaneseq
    %v47 = vshrl.u32 %v46, 7
    %v48 = vsub.s32 5, %v47
    %v49 = vrot.slane %v24, %v48
    %v50 = vlaneseq
    %v51 = vshrl.u32 %v50, 7
    %v52 = vsub.s32 6, %v51
    %v53 = vrot.slane %v24, %v52
    %v54 = vlaneseq
    %v55 = vshrl.u32 %v54, 7
    %v56 = vsub.s32 7, %v55
    %v57 = vrot.slane %v24, %v56
    %vm66 = vcmask 1040384
    %v67 = vsel %vm66, %v29, 0.0
    %v68 = vsel %vm66, %v33, 0.0
    %v69 = vadd.f32 %v67, %v68
    %v70 = vsel %vm66, %v37, 0.0
    %v71 = vadd.f32 %v69, %v70
    %v72 = vsel %vm66, %v41, 0.0
    %v73 = vadd.f32 %v71, %v72
    %v74 = vsel %vm66, %v45, 0.0
    %v75 = vadd.f32 %v73, %v74
    %v76 = vsel %vm66, %v49, 0.0
    %v77 = vadd.f32 %v75, %v76
    %v78 = vsel %vm66, %v53, 0.0
    %v79 = vadd.f32 %v77, %v78
    %v80 = vsel %vm66, %v57, 0.0
    %v81 = vadd.f32 %v79, %v80
    %82 = vadd.xlane.f32.xlu0 %v81
    %v83 = vpop.xlane.xlu0 %82
    %vm84 = vcmask 0
    %85 = vst.msk [vmem:[#allocation2] sm:$0x1] %vm84, %v83
    %v86 = vld [vmem:[%s1] sm:$0xff]
    %v87 = vld [vmem:[%s3] sm:$0xff]
    %v88 = vmul.f32 %v86, %v87
    %v90 = vlaneseq
    %v91 = vshrl.u32 %v90, 7
    %v92 = vsub.s32 0, %v91
    %v93 = vrot.slane %v88, %v92
    %v94 = vlaneseq
    %v95 = vshrl.u32 %v94, 7
    %v96 = vsub.s32 1, %v95
    %v97 = vrot.slane %v88, %v96
    %v98 = vlaneseq
    %v99 = vshrl.u32 %v98, 7
    %v100 = vsub.s32 2, %v99
    %v101 = vrot.slane %v88, %v100
    %v102 = vlaneseq
    %v103 = vshrl.u32 %v102, 7
    %v104 = vsub.s32 3, %v103
    %v105 = vrot.slane %v88, %v104
    %v106 = vlaneseq
    %v107 = vshrl.u32 %v106, 7
    %v108 = vsub.s32 4, %v107
    %v109 = vrot.slane %v88, %v108
    %v110 = vlaneseq
    %v111 = vshrl.u32 %v110, 7
    %v112 = vsub.s32 5, %v111
    %v113 = vrot.slane %v88, %v112
    %v114 = vlaneseq
    %v115 = vshrl.u32 %v114, 7
    %v116 = vsub.s32 6, %v115
    %v117 = vrot.slane %v88, %v116
    %v118 = vlaneseq
    %v119 = vshrl.u32 %v118, 7
    %v120 = vsub.s32 7, %v119
    %v121 = vrot.slane %v88, %v120
    %v130 = vsel %vm66, %v93, 0.0
    %v131 = vsel %vm66, %v97, 0.0
    %v132 = vadd.f32 %v130, %v131
    %v133 = vsel %vm66, %v101, 0.0
    %v134 = vadd.f32 %v132, %v133
    %v135 = vsel %vm66, %v105, 0.0
    %v136 = vadd.f32 %v134, %v135
    %v137 = vsel %vm66, %v109, 0.0
    %v138 = vadd.f32 %v136, %v137
    %v139 = vsel %vm66, %v113, 0.0
    %v140 = vadd.f32 %v138, %v139
    %v141 = vsel %vm66, %v117, 0.0
    %v142 = vadd.f32 %v140, %v141
    %v143 = vsel %vm66, %v121, 0.0
    %v144 = vadd.f32 %v142, %v143
    %145 = vadd.xlane.f32.xlu0 %v144
    %v146 = vpop.xlane.xlu0 %145
    %147 = vst.msk [vmem:[#allocation4] sm:$0x1] %vm84, %v146
    %v149 = vlaneseq
    %v150 = vshrl.u32 %v149, 7
    %v151 = vsub.s32 0, %v150
    %v152 = vrot.slane %v22, %v151
    %v153 = vlaneseq
    %v154 = vshrl.u32 %v153, 7
    %v155 = vsub.s32 1, %v154
    %v156 = vrot.slane %v22, %v155
    %v157 = vlaneseq
    %v158 = vshrl.u32 %v157, 7
    %v159 = vsub.s32 2, %v158
    %v160 = vrot.slane %v22, %v159
    %v161 = vlaneseq
    %v162 = vshrl.u32 %v161, 7
    %v163 = vsub.s32 3, %v162
    %v164 = vrot.slane %v22, %v163
    %v165 = vlaneseq
    %v166 = vshrl.u32 %v165, 7
    %v167 = vsub.s32 4, %v166
    %v168 = vrot.slane %v22, %v167
    %v169 = vlaneseq
    %v170 = vshrl.u32 %v169, 7
    %v171 = vsub.s32 5, %v170
    %v172 = vrot.slane %v22, %v171
    %v173 = vlaneseq
    %v174 = vshrl.u32 %v173, 7
    %v175 = vsub.s32 6, %v174
    %v176 = vrot.slane %v22, %v175
    %v177 = vlaneseq
    %v178 = vshrl.u32 %v177, 7
    %v179 = vsub.s32 7, %v178
    %v180 = vrot.slane %v22, %v179
    %v189 = vsel %vm66, %v152, 0.0
    %v190 = vsel %vm66, %v156, 0.0
    %v191 = vadd.f32 %v189, %v190
    %v192 = vsel %vm66, %v160, 0.0
    %v193 = vadd.f32 %v191, %v192
    %v194 = vsel %vm66, %v164, 0.0
    %v195 = vadd.f32 %v193, %v194
    %v196 = vsel %vm66, %v168, 0.0
    %v197 = vadd.f32 %v195, %v196
    %v198 = vsel %vm66, %v172, 0.0
    %v199 = vadd.f32 %v197, %v198
    %v200 = vsel %vm66, %v176, 0.0
    %v201 = vadd.f32 %v199, %v200
    %v202 = vsel %vm66, %v180, 0.0
    %v203 = vadd.f32 %v201, %v202
    %204 = vadd.xlane.f32.xlu0 %v203
    %v205 = vpop.xlane.xlu0 %204
    %206 = vst.msk [vmem:[#allocation6] sm:$0x1] %vm84, %v205
    // Predicated region
    $region18: #{multibox_loss.7} parent=1 // pred_check
      _
    $region19: #{multibox_loss.7} parent=1 // pred_check_branch
      %208 = sbr.rel (0) target = $region21
    $region20: #{multibox_loss.7} parent=1 // pred_region
      %s210 = ssub.s32 16, 16
      %211 = vsyncadd [#allocation3], %s210
      %s213 = sshll.u32 [#allocation2], 4
      %s214 = int_to_ptr.vmem [resolvable:$true] %s213
      %216 = dma.vmem_to_hbm [thread:$0]  %s214, 16, %s4, [#allocation3]
    $region21: #{multibox_loss.7} parent=1 // pred_fallthru
      _
    // Predicated region
    $region22: #{multibox_loss.7} parent=1 // pred_check
      _
    $region23: #{multibox_loss.7} parent=1 // pred_check_branch
      %218 = sbr.rel (0) target = $region25
    $region24: #{multibox_loss.7} parent=1 // pred_region
      %s220 = ssub.s32 16, 16
      %221 = vsyncadd [#allocation5], %s220
      %s223 = sshll.u32 [#allocation4], 4
      %s224 = int_to_ptr.vmem [resolvable:$true] %s223
      %226 = dma.vmem_to_hbm [thread:$0]  %s224, 16, %s5, [#allocation5]
    $region25: #{multibox_loss.7} parent=1 // pred_fallthru
      _
    // Predicated region
    $region26: #{multibox_loss.7} parent=1 // pred_check
      _
    $region27: #{multibox_loss.7} parent=1 // pred_check_branch
      %228 = sbr.rel (0) target = $region29
    $region28: #{multibox_loss.7} parent=1 // pred_region
      %s230 = ssub.s32 16, 16
      %231 = vsyncadd [#allocation5], %s230
      %s233 = sshll.u32 [#allocation6], 4
      %s234 = int_to_ptr.vmem [resolvable:$true] %s233
      %236 = dma.vmem_to_hbm [thread:$0]  %s234, 16, %s6, [#allocation5]
    $region29: #{multibox_loss.7} parent=1 // pred_fallthru
      _
    // Predicated region
    $region30: #{multibox_loss.7} parent=1 // pred_check
      _
    $region31: #{multibox_loss.7} parent=1 // pred_check_branch
      %238 = sbr.rel (0) target = $region33
    $region32: #{multibox_loss.7} parent=1 // pred_region
      %239 = dma.done [#allocation3], 16
    $region33: #{multibox_loss.7} parent=1 // pred_fallthru
      _
    // Predicated region
    $region34: #{multibox_loss.7} parent=1 // pred_check
      _
    $region35: #{multibox_loss.7} parent=1 // pred_check_branch
      %241 = sbr.rel (0) target = $region37
    $region36: #{multibox_loss.7} parent=1 // pred_region
      %242 = dma.done [#allocation5], 16
    $region37: #{multibox_loss.7} parent=1 // pred_fallthru
      _
    // Predicated region
    $region38: #{multibox_loss.7} parent=1 // pred_check
      _
    $region39: #{multibox_loss.7} parent=1 // pred_check_branch
      %244 = sbr.rel (0) target = $region41
    $region40: #{multibox_loss.7} parent=1 // pred_region
      %245 = dma.done [#allocation5], 16
    $region41: #{multibox_loss.7} parent=1 // pred_fallthru
      _
    %246 = vsyncpa [#allocation3], 1
    %247 = vsyncpa [#allocation5], 1

</llo_original>
